<compile_context>
chip_gen: v7x
topology: tpu7x:2x2x1
jax: 0.10.0
libtpu: 0.0.40
codegen_flags: <defaults>
</compile_context>

<pallas_src>
import jax
import jax.numpy as jnp
from jax.experimental import pallas as pl
from jax.experimental.pallas import tpu as pltpu


def encoder_kernel(x_ref, w1_ref, w2_ref, out_ref):
    # Two chained MXU matmuls fused in one kernel; hidden activation stays in
    # vregs/VMEM. f32 x is cast to bf16 in-kernel (VPU), f32 accumulation.
    x_bf = x_ref[...].astype(jnp.bfloat16)
    h = jnp.dot(x_bf, w1_ref[...], preferred_element_type=jnp.float32)
    y = jnp.dot(h.astype(jnp.bfloat16), w2_ref[...],
                preferred_element_type=jnp.float32)
    out_ref[...] = y.astype(out_ref.dtype)


def prepare_encoder_params(w1, w2):
    """Cast weights to bf16 once at model setup, not per forward call."""
    return w1.astype(jnp.bfloat16), w2.astype(jnp.bfloat16)


def _choose_block_b(B):
    # Single grid step for small/medium batches: no per-step pipeline overhead
    # on single-TC chips and a >=256-row LHS fills the 256-wide MXU (v6e/v7x).
    if B <= 1024:
        return B
    # Large batches: 1024-row tiles (multiple of 256) so the "parallel" batch
    # axis can shard across v7x's 2 TensorCores with full MXU utilization.
    return 1024


def encoder_forward(x, w1_bf, w2_bf, *, block_b=None, out_dtype=jnp.float32):
    """x: [B, 784] f32, w1_bf: [784, 256] bf16, w2_bf: [256, 128] bf16 -> [B, 128]."""
    B, D_in = x.shape
    D_hid = w1_bf.shape[1]
    D_out = w2_bf.shape[1]
    assert w1_bf.shape == (D_in, D_hid)
    assert w2_bf.shape == (D_hid, D_out)

    bm = _choose_block_b(B) if block_b is None else min(block_b, B)
    n_tiles = pl.cdiv(B, bm)  # ragged tail handled by Pallas block masking

    flops = 2 * B * (D_in * D_hid + D_hid * D_out)
    bytes_accessed = (
        B * D_in * 4                                   # f32 x in (single DMA pass)
        + (D_in * D_hid + D_hid * D_out) * 2           # bf16 weights, resident
        + B * D_out * jnp.dtype(out_dtype).itemsize    # output
    )

    # Raise the scoped VMEM limit only if this tile footprint would exceed
    # v5e's 16 MiB default (double-buffered x/out tiles + resident weights).
    vmem_needed = (
        2 * bm * D_in * 4
        + 2 * (D_in * D_hid + D_hid * D_out) * 2
        + 2 * bm * D_out * 4
        + bm * D_hid * 4
    )
    vmem_limit = None
    if vmem_needed > 16 * 1024 * 1024:
        vmem_limit = min(int(vmem_needed * 3 // 2), 64 * 1024 * 1024)

    compiler_params = pltpu.CompilerParams(
        dimension_semantics=("parallel",),  # megacore sharding on v7x
        vmem_limit_bytes=vmem_limit,
    )

    out = pl.pallas_call(
        encoder_kernel,
        out_shape=jax.ShapeDtypeStruct((B, D_out), out_dtype),
        grid=(n_tiles,),
        in_specs=[
            pl.BlockSpec((bm, D_in), lambda i: (i, 0)),      # x: tiled on batch
            pl.BlockSpec((D_in, D_hid), lambda i: (0, 0)),   # w1: resident
            pl.BlockSpec((D_hid, D_out), lambda i: (0, 0)),  # w2: resident
        ],
        out_specs=pl.BlockSpec((bm, D_out), lambda i: (i, 0)),
        compiler_params=compiler_params,
        cost_estimate=pl.CostEstimate(
            flops=flops, transcendentals=0, bytes_accessed=bytes_accessed
        ),
    )(x, w1_bf, w2_bf)

    return out


def reference_forward_bf16(x, w1, w2):
    # Same numerics as the kernel: bf16 operands, f32 accumulation.
    xb = x.astype(jnp.bfloat16).astype(jnp.float32)
    w1b = w1.astype(jnp.bfloat16).astype(jnp.float32)
    w2b = w2.astype(jnp.bfloat16).astype(jnp.float32)
    h = xb @ w1b
    hb = h.astype(jnp.bfloat16).astype(jnp.float32)
    return hb @ w2b


def reference_forward_f32(x, w1, w2):
    return (x.astype(jnp.float32) @ w1.astype(jnp.float32)) @ w2.astype(jnp.float32)


if __name__ == "__main__":
    key = jax.random.PRNGKey(0)
    k_x, k_w1, k_w2 = jax.random.split(key, 3)

    # Module dims are fixed by the spec (784 -> 256 -> 128).
    B, D_IN, D_HID, D_OUT = 256, 784, 256, 128

    x = jax.random.normal(k_x, (B, D_IN), dtype=jnp.float32)
    # deterministic synthetic parameters (shapes from HebbianLayer(784,256) / (256,128))
    w1 = jax.random.normal(k_w1, (D_IN, D_HID), dtype=jnp.float32) * 0.02
    w2 = jax.random.normal(k_w2, (D_HID, D_OUT), dtype=jnp.float32) * 0.02

    # Weights cast to bf16 once at setup.
    w1_bf, w2_bf = prepare_encoder_params(w1, w2)

    # --- Test 1: default block sizing (single grid step for B=256) ---
    out = encoder_forward(x, w1_bf, w2_bf)
    out = jax.block_until_ready(out)
    assert out.shape == (B, D_OUT), out.shape

    ref_bf = reference_forward_bf16(x, w1, w2)
    err_bf = float(jnp.max(jnp.abs(out - ref_bf)))
    assert jnp.allclose(out, ref_bf, atol=2e-2, rtol=2e-2), err_bf

    ref_f32 = reference_forward_f32(x, w1, w2)
    err_f32 = float(jnp.max(jnp.abs(out - ref_f32)))
    assert jnp.allclose(out, ref_f32, atol=1e-1, rtol=1e-1), err_f32

    # --- Test 2: ragged batch with a forced small tile (masked tail block) ---
    B2 = 200
    x2 = x[:B2]
    out2 = encoder_forward(x2, w1_bf, w2_bf, block_b=128)
    out2 = jax.block_until_ready(out2)
    assert out2.shape == (B2, D_OUT), out2.shape
    err2 = float(jnp.max(jnp.abs(out2 - ref_bf[:B2])))
    assert jnp.allclose(out2, ref_bf[:B2], atol=2e-2, rtol=2e-2), err2

    print("KERNEL_OK")
</pallas_src>

<mosaic_0001>
module attributes {stable_mosaic.version = 11 : i64} {
  func.func @encoder_kernel(%arg0: i32, %arg1: memref<256x784xf32, #tpu.memory_space<vmem>>, %arg2: memref<784x256xbf16, #tpu.memory_space<vmem>>, %arg3: memref<256x128xbf16, #tpu.memory_space<vmem>>, %arg4: memref<256x128xf32, #tpu.memory_space<vmem>>) attributes {dimension_semantics = [#tpu.dimension_semantics<parallel>], iteration_bounds = array<i64: 1>, scalar_prefetch = 0 : i64, scratch_operands = 0 : i64, tpu.core_type = #tpu.core_type<tc>, window_params = [{transform_indices = @transform_0, window_bounds = array<i64: 256, 784>}, {pipeline_mode = #tpu.pipeline_mode<synchronous>, transform_indices = @transform_1, window_bounds = array<i64: 784, 256>}, {pipeline_mode = #tpu.pipeline_mode<synchronous>, transform_indices = @transform_2, window_bounds = array<i64: 256, 128>}, {transform_indices = @transform_3, window_bounds = array<i64: 256, 128>}]} {
    %c0 = arith.constant 0 : index
    %c0_0 = arith.constant 0 : index
    %0 = vector.load %arg1[%c0, %c0_0] : memref<256x784xf32, #tpu.memory_space<vmem>>, vector<256x784xf32>
    %1 = arith.truncf %0 : vector<256x784xf32> to vector<256x784xbf16>
    %c0_1 = arith.constant 0 : index
    %c0_2 = arith.constant 0 : index
    %2 = vector.load %arg2[%c0_1, %c0_2] : memref<784x256xbf16, #tpu.memory_space<vmem>>, vector<784x256xbf16>
    %cst = arith.constant dense<0.000000e+00> : vector<256x256xf32>
    %3 = tpu.matmul %1, %2, %cst {dimension_numbers = #tpu.dot_dimension_numbers<[1], [0], [0], [1], [0, 0, 1, 1], [], []>} : vector<256x784xbf16>, vector<784x256xbf16>, vector<256x256xf32> -> vector<256x256xf32>
    %4 = arith.truncf %3 : vector<256x256xf32> to vector<256x256xbf16>
    %c0_3 = arith.constant 0 : index
    %c0_4 = arith.constant 0 : index
    %5 = vector.load %arg3[%c0_3, %c0_4] : memref<256x128xbf16, #tpu.memory_space<vmem>>, vector<256x128xbf16>
    %cst_5 = arith.constant dense<0.000000e+00> : vector<256x128xf32>
    %6 = tpu.matmul %4, %5, %cst_5 {dimension_numbers = #tpu.dot_dimension_numbers<[1], [0], [0], [1], [0, 0, 1, 1], [], []>} : vector<256x256xbf16>, vector<256x128xbf16>, vector<256x128xf32> -> vector<256x128xf32>
    %c0_6 = arith.constant 0 : index
    %c0_7 = arith.constant 0 : index
    %7 = vector.load %arg4[%c0_6, %c0_7] : memref<256x128xf32, #tpu.memory_space<vmem>>, vector<256x128xf32>
    tpu.vector_store %arg4[%c0_6, %c0_7], %6 {strides = array<i32>} : memref<256x128xf32, #tpu.memory_space<vmem>>, vector<256x128xf32>,
    return
  }
  func.func @transform_0(%arg0: i32) -> (i32, i32) {
    %c0_i32 = arith.constant 0 : i32
    %c0_i32_0 = arith.constant 0 : i32
    return %arg0, %c0_i32 : i32, i32
  }
  func.func @transform_1(%arg0: i32) -> (i32, i32) {
    %c0_i32 = arith.constant 0 : i32
    %c0_i32_0 = arith.constant 0 : i32
    %c0_i32_1 = arith.constant 0 : i32
    return %c0_i32, %c0_i32_0 : i32, i32
  }
  func.func @transform_2(%arg0: i32) -> (i32, i32) {
    %c0_i32 = arith.constant 0 : i32
    %c0_i32_0 = arith.constant 0 : i32
    %c0_i32_1 = arith.constant 0 : i32
    return %c0_i32, %c0_i32_0 : i32, i32
  }
  func.func @transform_3(%arg0: i32) -> (i32, i32) {
    %c0_i32 = arith.constant 0 : i32
    %c0_i32_0 = arith.constant 0 : i32
    return %arg0, %c0_i32 : i32, i32
  }
}

</mosaic_0001>

<llo_original>
// kernel: tpu_custom_call.1
$region0: #{tpu_custom_call.1}
  #allocation0 [shape = 'u32[]', space=smem, size = 0x4, offset = 0x4, fixed_abs, tag = 'smem constant byte address 0x4 - core index']
  #allocation1 [shape = 'u32[144,128]{1,0:T(1,128)}', space=vmem, size = 0x12000, scoped, tag = 'internal scratch']
  %s0 = inlined_call_operand.vmem [shape: f32[256,784], index: 0, kind: input, shape index: {}]
  %s1 = inlined_call_operand.vmem [shape: bf16[784,256], index: 1, kind: input, shape index: {}]
  %s2 = inlined_call_operand.vmem [shape: bf16[256,128], index: 2, kind: input, shape index: {}]
  %s3 = inlined_call_operand.hbm [shape: f32[256,128], index: 3, kind: output, shape index: {}]
  %s4 = sld [smem:[#allocation0]]
  $region22: #{tpu_custom_call.1} parent=0
    _
  %s6 = ssub.s32 1, %s4
  %s7 = scalar_select 0, %s6, %s4
  $region1: #{tpu_custom_call.1} parent=0
    #allocation2 [shape = 'u8[131072]{0}', space=vmem, size = 0x20000, scoped, tag = 'output window, operand 0, single buffered']
    #allocation3 [shape = 's32[1]{0}', space=sflag, size = 0x4, scoped, tag = 'scoped memory for tpu_custom_call.1']
    %8 = vsyncpa [#allocation3], 0
    // Predicated region
    $region2: #{tpu_custom_call.1} parent=1 // pred_check
      _
    $region3: #{tpu_custom_call.1} parent=1 // pred_check_branch
      %10 = sbr.rel (0) target = $region5
    $region4: #{tpu_custom_call.1} parent=1 // pred_region
      _
    $region5: #{tpu_custom_call.1} parent=1 // pred_fallthru
      _
    // Predicated region
    $region6: #{tpu_custom_call.1} parent=1 // pred_check
      _
    $region7: #{tpu_custom_call.1} parent=1 // pred_check_branch
      %12 = sbr.rel (0) target = $region9
    $region8: #{tpu_custom_call.1} parent=1 // pred_region
      _
    $region9: #{tpu_custom_call.1} parent=1 // pred_fallthru
      _
    // Predicated region
    $region10: #{tpu_custom_call.1} parent=1 // pred_check
      _
    $region11: #{tpu_custom_call.1} parent=1 // pred_check_branch
      %14 = sbr.rel (0) target = $region13
    $region12: #{tpu_custom_call.1} parent=1 // pred_region
      _
    $region13: #{tpu_custom_call.1} parent=1 // pred_fallthru
      _
    %v16 = vld [vmem:[%s0] sm:$0xff]
    %v17 = vld [vmem:[%s0 + $0x8] sm:$0xff]
    %v18 = vld [vmem:[%s0 + $0x10] sm:$0xff]
    %v19 = vld [vmem:[%s0 + $0x18] sm:$0xff]
    %v20 = vld [vmem:[%s0 + $0x20] sm:$0xff]
    %v21 = vld [vmem:[%s0 + $0x28] sm:$0xff]
    %v22 = vld [vmem:[%s0 + $0x30] sm:$0xff]
    %v23 = vld [vmem:[%s0 + $0x38] sm:$0xff]
    %v24 = vld [vmem:[%s0 + $0x40] sm:$0xff]
    %v25 = vld [vmem:[%s0 + $0x48] sm:$0xff]
    %v26 = vld [vmem:[%s0 + $0x50] sm:$0xff]
    %v27 = vld [vmem:[%s0 + $0x58] sm:$0xff]
    %v28 = vld [vmem:[%s0 + $0x60] sm:$0xff]
    %v29 = vld [vmem:[%s0 + $0x68] sm:$0xff]
    %v30 = vld [vmem:[%s0 + $0x70] sm:$0xff]
    %v31 = vld [vmem:[%s0 + $0x78] sm:$0xff]
    %v32 = vld [vmem:[%s0 + $0x80] sm:$0xff]
    %v33 = vld [vmem:[%s0 + $0x88] sm:$0xff]
    %v34 = vld [vmem:[%s0 + $0x90] sm:$0xff]
    %v35 = vld [vmem:[%s0 + $0x98] sm:$0xff]
    %v36 = vld [vmem:[%s0 + $0xa0] sm:$0xff]
    %v37 = vld [vmem:[%s0 + $0xa8] sm:$0xff]
    %v38 = vld [vmem:[%s0 + $0xb0] sm:$0xff]
    %v39 = vld [vmem:[%s0 + $0xb8] sm:$0xff]
    %v40 = vld [vmem:[%s0 + $0xc0] sm:$0xff]
    %v41 = vld [vmem:[%s0 + $0xc8] sm:$0xff]
    %v42 = vld [vmem:[%s0 + $0xd0] sm:$0xff]
    %v43 = vld [vmem:[%s0 + $0xd8] sm:$0xff]
    %v44 = vld [vmem:[%s0 + $0xe0] sm:$0xff]
    %v45 = vld [vmem:[%s0 + $0xe8] sm:$0xff]
    %v46 = vld [vmem:[%s0 + $0xf0] sm:$0xff]
    %v47 = vld [vmem:[%s0 + $0xf8] sm:$0xff]
    %v48 = vld [vmem:[%s0 + $0x100] sm:$0xff]
    %v49 = vld [vmem:[%s0 + $0x108] sm:$0xff]
    %v50 = vld [vmem:[%s0 + $0x110] sm:$0xff]
    %v51 = vld [vmem:[%s0 + $0x118] sm:$0xff]
    %v52 = vld [vmem:[%s0 + $0x120] sm:$0xff]
    %v53 = vld [vmem:[%s0 + $0x128] sm:$0xff]
    %v54 = vld [vmem:[%s0 + $0x130] sm:$0xff]
    %v55 = vld [vmem:[%s0 + $0x138] sm:$0xff]
    %v56 = vld [vmem:[%s0 + $0x140] sm:$0xff]
    %v57 = vld [vmem:[%s0 + $0x148] sm:$0xff]
    %v58 = vld [vmem:[%s0 + $0x150] sm:$0xff]
    %v59 = vld [vmem:[%s0 + $0x158] sm:$0xff]
    %v60 = vld [vmem:[%s0 + $0x160] sm:$0xff]
    %v61 = vld [vmem:[%s0 + $0x168] sm:$0xff]
    %v62 = vld [vmem:[%s0 + $0x170] sm:$0xff]
    %v63 = vld [vmem:[%s0 + $0x178] sm:$0xff]
    %v64 = vld [vmem:[%s0 + $0x180] sm:$0xff]
    %v65 = vld [vmem:[%s0 + $0x188] sm:$0xff]
    %v66 = vld [vmem:[%s0 + $0x190] sm:$0xff]
    %v67 = vld [vmem:[%s0 + $0x198] sm:$0xff]
    %v68 = vld [vmem:[%s0 + $0x1a0] sm:$0xff]
    %v69 = vld [vmem:[%s0 + $0x1a8] sm:$0xff]
    %v70 = vld [vmem:[%s0 + $0x1b0] sm:$0xff]
    %v71 = vld [vmem:[%s0 + $0x1b8] sm:$0xff]
    %v72 = vld [vmem:[%s0 + $0x1c0] sm:$0xff]
    %v73 = vld [vmem:[%s0 + $0x1c8] sm:$0xff]
    %v74 = vld [vmem:[%s0 + $0x1d0] sm:$0xff]
    %v75 = vld [vmem:[%s0 + $0x1d8] sm:$0xff]
    %v76 = vld [vmem:[%s0 + $0x1e0] sm:$0xff]
    %v77 = vld [vmem:[%s0 + $0x1e8] sm:$0xff]
    %v78 = vld [vmem:[%s0 + $0x1f0] sm:$0xff]
    %v79 = vld [vmem:[%s0 + $0x1f8] sm:$0xff]
    %v80 = vld [vmem:[%s0 + $0x200] sm:$0xff]
    %v81 = vld [vmem:[%s0 + $0x208] sm:$0xff]
    %v82 = vld [vmem:[%s0 + $0x210] sm:$0xff]
    %v83 = vld [vmem:[%s0 + $0x218] sm:$0xff]
    %v84 = vld [vmem:[%s0 + $0x220] sm:$0xff]
    %v85 = vld [vmem:[%s0 + $0x228] sm:$0xff]
    %v86 = vld [vmem:[%s0 + $0x230] sm:$0xff]
    %v87 = vld [vmem:[%s0 + $0x238] sm:$0xff]
    %v88 = vld [vmem:[%s0 + $0x240] sm:$0xff]
    %v89 = vld [vmem:[%s0 + $0x248] sm:$0xff]
    %v90 = vld [vmem:[%s0 + $0x250] sm:$0xff]
    %v91 = vld [vmem:[%s0 + $0x258] sm:$0xff]
    %v92 = vld [vmem:[%s0 + $0x260] sm:$0xff]
    %v93 = vld [vmem:[%s0 + $0x268] sm:$0xff]
    %v94 = vld [vmem:[%s0 + $0x270] sm:$0xff]
    %v95 = vld [vmem:[%s0 + $0x278] sm:$0xff]
    %v96 = vld [vmem:[%s0 + $0x280] sm:$0xff]
    %v97 = vld [vmem:[%s0 + $0x288] sm:$0xff]
    %v98 = vld [vmem:[%s0 + $0x290] sm:$0xff]
    %v99 = vld [vmem:[%s0 + $0x298] sm:$0xff]
    %v100 = vld [vmem:[%s0 + $0x2a0] sm:$0xff]
    %v101 = vld [vmem:[%s0 + $0x2a8] sm:$0xff]
    %v102 = vld [vmem:[%s0 + $0x2b0] sm:$0xff]
    %v103 = vld [vmem:[%s0 + $0x2b8] sm:$0xff]
    %v104 = vld [vmem:[%s0 + $0x2c0] sm:$0xff]
    %v105 = vld [vmem:[%s0 + $0x2c8] sm:$0xff]
    %v106 = vld [vmem:[%s0 + $0x2d0] sm:$0xff]
    %v107 = vld [vmem:[%s0 + $0x2d8] sm:$0xff]
    %v108 = vld [vmem:[%s0 + $0x2e0] sm:$0xff]
    %v109 = vld [vmem:[%s0 + $0x2e8] sm:$0xff]
    %v110 = vld [vmem:[%s0 + $0x2f0] sm:$0xff]
    %v111 = vld [vmem:[%s0 + $0x2f8] sm:$0xff]
    %v112 = vld [vmem:[%s0 + $0x300] sm:$0xff]
    %v113 = vld [vmem:[%s0 + $0x308] sm:$0xff]
    %v114 = vld [vmem:[%s0 + $0x310] sm:$0xff]
    %v115 = vld [vmem:[%s0 + $0x318] sm:$0xff]
    %v116 = vld [vmem:[%s0 + $0x320] sm:$0xff]
    %v117 = vld [vmem:[%s0 + $0x328] sm:$0xff]
    %v118 = vld [vmem:[%s0 + $0x330] sm:$0xff]
    %v119 = vld [vmem:[%s0 + $0x338] sm:$0xff]
    %v120 = vld [vmem:[%s0 + $0x340] sm:$0xff]
    %v121 = vld [vmem:[%s0 + $0x348] sm:$0xff]
    %v122 = vld [vmem:[%s0 + $0x350] sm:$0xff]
    %v123 = vld [vmem:[%s0 + $0x358] sm:$0xff]
    %v124 = vld [vmem:[%s0 + $0x360] sm:$0xff]
    %v125 = vld [vmem:[%s0 + $0x368] sm:$0xff]
    %v126 = vld [vmem:[%s0 + $0x370] sm:$0xff]
    %v127 = vld [vmem:[%s0 + $0x378] sm:$0xff]
    %v128 = vld [vmem:[%s0 + $0x380] sm:$0xff]
    %v129 = vld [vmem:[%s0 + $0x388] sm:$0xff]
    %v130 = vld [vmem:[%s0 + $0x390] sm:$0xff]
    %v131 = vld [vmem:[%s0 + $0x398] sm:$0xff]
    %v132 = vld [vmem:[%s0 + $0x3a0] sm:$0xff]
    %v133 = vld [vmem:[%s0 + $0x3a8] sm:$0xff]
    %v134 = vld [vmem:[%s0 + $0x3b0] sm:$0xff]
    %v135 = vld [vmem:[%s0 + $0x3b8] sm:$0xff]
    %v136 = vld [vmem:[%s0 + $0x3c0] sm:$0xff]
    %v137 = vld [vmem:[%s0 + $0x3c8] sm:$0xff]
    %v138 = vld [vmem:[%s0 + $0x3d0] sm:$0xff]
    %v139 = vld [vmem:[%s0 + $0x3d8] sm:$0xff]
    %v140 = vld [vmem:[%s0 + $0x3e0] sm:$0xff]
    %v141 = vld [vmem:[%s0 + $0x3e8] sm:$0xff]
    %v142 = vld [vmem:[%s0 + $0x3f0] sm:$0xff]
    %v143 = vld [vmem:[%s0 + $0x3f8] sm:$0xff]
    %v144 = vld [vmem:[%s0 + $0x400] sm:$0xff]
    %v145 = vld [vmem:[%s0 + $0x408] sm:$0xff]
    %v146 = vld [vmem:[%s0 + $0x410] sm:$0xff]
    %v147 = vld [vmem:[%s0 + $0x418] sm:$0xff]
    %v148 = vld [vmem:[%s0 + $0x420] sm:$0xff]
    %v149 = vld [vmem:[%s0 + $0x428] sm:$0xff]
    %v150 = vld [vmem:[%s0 + $0x430] sm:$0xff]
    %v151 = vld [vmem:[%s0 + $0x438] sm:$0xff]
    %v152 = vld [vmem:[%s0 + $0x440] sm:$0xff]
    %v153 = vld [vmem:[%s0 + $0x448] sm:$0xff]
    %v154 = vld [vmem:[%s0 + $0x450] sm:$0xff]
    %v155 = vld [vmem:[%s0 + $0x458] sm:$0xff]
    %v156 = vld [vmem:[%s0 + $0x460] sm:$0xff]
    %v157 = vld [vmem:[%s0 + $0x468] sm:$0xff]
    %v158 = vld [vmem:[%s0 + $0x470] sm:$0xff]
    %v159 = vld [vmem:[%s0 + $0x478] sm:$0xff]
    %v160 = vld [vmem:[%s0 + $0x480] sm:$0xff]
    %v161 = vld [vmem:[%s0 + $0x488] sm:$0xff]
    %v162 = vld [vmem:[%s0 + $0x490] sm:$0xff]
    %v163 = vld [vmem:[%s0 + $0x498] sm:$0xff]
    %v164 = vld [vmem:[%s0 + $0x4a0] sm:$0xff]
    %v165 = vld [vmem:[%s0 + $0x4a8] sm:$0xff]
    %v166 = vld [vmem:[%s0 + $0x4b0] sm:$0xff]
    %v167 = vld [vmem:[%s0 + $0x4b8] sm:$0xff]
    %v168 = vld [vmem:[%s0 + $0x4c0] sm:$0xff]
    %v169 = vld [vmem:[%s0 + $0x4c8] sm:$0xff]
    %v170 = vld [vmem:[%s0 + $0x4d0] sm:$0xff]
    %v171 = vld [vmem:[%s0 + $0x4d8] sm:$0xff]
    %v172 = vld [vmem:[%s0 + $0x4e0] sm:$0xff]
    %v173 = vld [vmem:[%s0 + $0x4e8] sm:$0xff]
    %v174 = vld [vmem:[%s0 + $0x4f0] sm:$0xff]
    %v175 = vld [vmem:[%s0 + $0x4f8] sm:$0xff]
    %v176 = vld [vmem:[%s0 + $0x500] sm:$0xff]
    %v177 = vld [vmem:[%s0 + $0x508] sm:$0xff]
    %v178 = vld [vmem:[%s0 + $0x510] sm:$0xff]
    %v179 = vld [vmem:[%s0 + $0x518] sm:$0xff]
    %v180 = vld [vmem:[%s0 + $0x520] sm:$0xff]
    %v181 = vld [vmem:[%s0 + $0x528] sm:$0xff]
    %v182 = vld [vmem:[%s0 + $0x530] sm:$0xff]
    %v183 = vld [vmem:[%s0 + $0x538] sm:$0xff]
    %v184 = vld [vmem:[%s0 + $0x540] sm:$0xff]
    %v185 = vld [vmem:[%s0 + $0x548] sm:$0xff]
    %v186 = vld [vmem:[%s0 + $0x550] sm:$0xff]
    %v187 = vld [vmem:[%s0 + $0x558] sm:$0xff]
    %v188 = vld [vmem:[%s0 + $0x560] sm:$0xff]
    %v189 = vld [vmem:[%s0 + $0x568] sm:$0xff]
    %v190 = vld [vmem:[%s0 + $0x570] sm:$0xff]
    %v191 = vld [vmem:[%s0 + $0x578] sm:$0xff]
    %v192 = vld [vmem:[%s0 + $0x580] sm:$0xff]
    %v193 = vld [vmem:[%s0 + $0x588] sm:$0xff]
    %v194 = vld [vmem:[%s0 + $0x590] sm:$0xff]
    %v195 = vld [vmem:[%s0 + $0x598] sm:$0xff]
    %v196 = vld [vmem:[%s0 + $0x5a0] sm:$0xff]
    %v197 = vld [vmem:[%s0 + $0x5a8] sm:$0xff]
    %v198 = vld [vmem:[%s0 + $0x5b0] sm:$0xff]
    %v199 = vld [vmem:[%s0 + $0x5b8] sm:$0xff]
    %v200 = vld [vmem:[%s0 + $0x5c0] sm:$0xff]
    %v201 = vld [vmem:[%s0 + $0x5c8] sm:$0xff]
    %v202 = vld [vmem:[%s0 + $0x5d0] sm:$0xff]
    %v203 = vld [vmem:[%s0 + $0x5d8] sm:$0xff]
    %v204 = vld [vmem:[%s0 + $0x5e0] sm:$0xff]
    %v205 = vld [vmem:[%s0 + $0x5e8] sm:$0xff]
    %v206 = vld [vmem:[%s0 + $0x5f0] sm:$0xff]
    %v207 = vld [vmem:[%s0 + $0x5f8] sm:$0xff]
    %v208 = vld [vmem:[%s0 + $0x600] sm:$0xff]
    %v209 = vld [vmem:[%s0 + $0x608] sm:$0xff]
    %v210 = vld [vmem:[%s0 + $0x610] sm:$0xff]
    %v211 = vld [vmem:[%s0 + $0x618] sm:$0xff]
    %v212 = vld [vmem:[%s0 + $0x620] sm:$0xff]
    %v213 = vld [vmem:[%s0 + $0x628] sm:$0xff]
    %v214 = vld [vmem:[%s0 + $0x630] sm:$0xff]
    %v215 = vld [vmem:[%s0 + $0x638] sm:$0xff]
    %v216 = vld [vmem:[%s0 + $0x640] sm:$0xff]
    %v217 = vld [vmem:[%s0 + $0x648] sm:$0xff]
    %v218 = vld [vmem:[%s0 + $0x650] sm:$0xff]
    %v219 = vld [vmem:[%s0 + $0x658] sm:$0xff]
    %v220 = vld [vmem:[%s0 + $0x660] sm:$0xff]
    %v221 = vld [vmem:[%s0 + $0x668] sm:$0xff]
    %v222 = vld [vmem:[%s0 + $0x670] sm:$0xff]
    %v223 = vld [vmem:[%s0 + $0x678] sm:$0xff]
    %v224 = vld [vmem:[%s0 + $0x680] sm:$0xff]
    %v225 = vld [vmem:[%s0 + $0x688] sm:$0xff]
    %v226 = vld [vmem:[%s0 + $0x690] sm:$0xff]
    %v227 = vld [vmem:[%s0 + $0x698] sm:$0xff]
    %v228 = vld [vmem:[%s0 + $0x6a0] sm:$0xff]
    %v229 = vld [vmem:[%s0 + $0x6a8] sm:$0xff]
    %v230 = vld [vmem:[%s0 + $0x6b0] sm:$0xff]
    %v231 = vld [vmem:[%s0 + $0x6b8] sm:$0xff]
    %v232 = vld [vmem:[%s0 + $0x6c0] sm:$0xff]
    %v233 = vld [vmem:[%s0 + $0x6c8] sm:$0xff]
    %v234 = vld [vmem:[%s0 + $0x6d0] sm:$0xff]
    %v235 = vld [vmem:[%s0 + $0x6d8] sm:$0xff]
    %v236 = vld [vmem:[%s0 + $0x6e0] sm:$0xff]
    %v237 = vld [vmem:[%s0 + $0x6e8] sm:$0xff]
    %v238 = vld [vmem:[%s0 + $0x6f0] sm:$0xff]
    %v239 = vld [vmem:[%s0 + $0x6f8] sm:$0xff]
    %v240 = vpack.c.bf16 %v23, %v16
    %v241 = vpack.c.bf16 %v24, %v17
    %v242 = vpack.c.bf16 %v25, %v18
    %v243 = vpack.c.bf16 %v26, %v19
    %v244 = vpack.c.bf16 %v27, %v20
    %v245 = vpack.c.bf16 %v28, %v21
    %v246 = vpack.c.bf16 %v29, %v22
    %v247 = vpack.c.bf16 %v37, %v30
    %v248 = vpack.c.bf16 %v38, %v31
    %v249 = vpack.c.bf16 %v39, %v32
    %v250 = vpack.c.bf16 %v40, %v33
    %v251 = vpack.c.bf16 %v41, %v34
    %v252 = vpack.c.bf16 %v42, %v35
    %v253 = vpack.c.bf16 %v43, %v36
    %v254 = vpack.c.bf16 %v51, %v44
    %v255 = vpack.c.bf16 %v52, %v45
    %v256 = vpack.c.bf16 %v53, %v46
    %v257 = vpack.c.bf16 %v54, %v47
    %v258 = vpack.c.bf16 %v55, %v48
    %v259 = vpack.c.bf16 %v56, %v49
    %v260 = vpack.c.bf16 %v57, %v50
    %v261 = vpack.c.bf16 %v65, %v58
    %v262 = vpack.c.bf16 %v66, %v59
    %v263 = vpack.c.bf16 %v67, %v60
    %v264 = vpack.c.bf16 %v68, %v61
    %v265 = vpack.c.bf16 %v69, %v62
    %v266 = vpack.c.bf16 %v70, %v63
    %v267 = vpack.c.bf16 %v71, %v64
    %v268 = vpack.c.bf16 %v79, %v72
    %v269 = vpack.c.bf16 %v80, %v73
    %v270 = vpack.c.bf16 %v81, %v74
    %v271 = vpack.c.bf16 %v82, %v75
    %v272 = vpack.c.bf16 %v83, %v76
    %v273 = vpack.c.bf16 %v84, %v77
    %v274 = vpack.c.bf16 %v85, %v78
    %v275 = vpack.c.bf16 %v93, %v86
    %v276 = vpack.c.bf16 %v94, %v87
    %v277 = vpack.c.bf16 %v95, %v88
    %v278 = vpack.c.bf16 %v96, %v89
    %v279 = vpack.c.bf16 %v97, %v90
    %v280 = vpack.c.bf16 %v98, %v91
    %v281 = vpack.c.bf16 %v99, %v92
    %v282 = vpack.c.bf16 %v107, %v100
    %v283 = vpack.c.bf16 %v108, %v101
    %v284 = vpack.c.bf16 %v109, %v102
    %v285 = vpack.c.bf16 %v110, %v103
    %v286 = vpack.c.bf16 %v111, %v104
    %v287 = vpack.c.bf16 %v112, %v105
    %v288 = vpack.c.bf16 %v113, %v106
    %v289 = vpack.c.bf16 %v121, %v114
    %v290 = vpack.c.bf16 %v122, %v115
    %v291 = vpack.c.bf16 %v123, %v116
    %v292 = vpack.c.bf16 %v124, %v117
    %v293 = vpack.c.bf16 %v125, %v118
    %v294 = vpack.c.bf16 %v126, %v119
    %v295 = vpack.c.bf16 %v127, %v120
    %v296 = vpack.c.bf16 %v135, %v128
    %v297 = vpack.c.bf16 %v136, %v129
    %v298 = vpack.c.bf16 %v137, %v130
    %v299 = vpack.c.bf16 %v138, %v131
    %v300 = vpack.c.bf16 %v139, %v132
    %v301 = vpack.c.bf16 %v140, %v133
    %v302 = vpack.c.bf16 %v141, %v134
    %v303 = vpack.c.bf16 %v149, %v142
    %v304 = vpack.c.bf16 %v150, %v143
    %v305 = vpack.c.bf16 %v151, %v144
    %v306 = vpack.c.bf16 %v152, %v145
    %v307 = vpack.c.bf16 %v153, %v146
    %v308 = vpack.c.bf16 %v154, %v147
    %v309 = vpack.c.bf16 %v155, %v148
    %v310 = vpack.c.bf16 %v163, %v156
    %v311 = vpack.c.bf16 %v164, %v157
    %v312 = vpack.c.bf16 %v165, %v158
    %v313 = vpack.c.bf16 %v166, %v159
    %v314 = vpack.c.bf16 %v167, %v160
    %v315 = vpack.c.bf16 %v168, %v161
    %v316 = vpack.c.bf16 %v169, %v162
    %v317 = vpack.c.bf16 %v177, %v170
    %v318 = vpack.c.bf16 %v178, %v171
    %v319 = vpack.c.bf16 %v179, %v172
    %v320 = vpack.c.bf16 %v180, %v173
    %v321 = vpack.c.bf16 %v181, %v174
    %v322 = vpack.c.bf16 %v182, %v175
    %v323 = vpack.c.bf16 %v183, %v176
    %v324 = vpack.c.bf16 %v191, %v184
    %v325 = vpack.c.bf16 %v192, %v185
    %v326 = vpack.c.bf16 %v193, %v186
    %v327 = vpack.c.bf16 %v194, %v187
    %v328 = vpack.c.bf16 %v195, %v188
    %v329 = vpack.c.bf16 %v196, %v189
    %v330 = vpack.c.bf16 %v197, %v190
    %v331 = vpack.c.bf16 %v205, %v198
    %v332 = vpack.c.bf16 %v206, %v199
    %v333 = vpack.c.bf16 %v207, %v200
    %v334 = vpack.c.bf16 %v208, %v201
    %v335 = vpack.c.bf16 %v209, %v202
    %v336 = vpack.c.bf16 %v210, %v203
    %v337 = vpack.c.bf16 %v211, %v204
    %v338 = vpack.c.bf16 %v219, %v212
    %v339 = vpack.c.bf16 %v220, %v213
    %v340 = vpack.c.bf16 %v221, %v214
    %v341 = vpack.c.bf16 %v222, %v215
    %v342 = vpack.c.bf16 %v223, %v216
    %v343 = vpack.c.bf16 %v224, %v217
    %v344 = vpack.c.bf16 %v225, %v218
    %v345 = vpack.c.bf16 %v233, %v226
    %v346 = vpack.c.bf16 %v234, %v227
    %v347 = vpack.c.bf16 %v235, %v228
    %v348 = vpack.c.bf16 %v236, %v229
    %v349 = vpack.c.bf16 %v237, %v230
    %v350 = vpack.c.bf16 %v238, %v231
    %v351 = vpack.c.bf16 %v239, %v232
    %v352 = vld [vmem:[%s1] sm:$0xff]
    %v353 = vld [vmem:[%s1 + $0x8] sm:$0xff]
    %v354 = vld [vmem:[%s1 + $0x10] sm:$0xff]
    %v355 = vld [vmem:[%s1 + $0x18] sm:$0xff]
    %v356 = vld [vmem:[%s1 + $0x20] sm:$0xff]
    %v357 = vld [vmem:[%s1 + $0x28] sm:$0xff]
    %v358 = vld [vmem:[%s1 + $0x30] sm:$0xff]
    %v359 = vld [vmem:[%s1 + $0x38] sm:$0xff]
    %v360 = vld [vmem:[%s1 + $0x40] sm:$0xff]
    %v361 = vld [vmem:[%s1 + $0x48] sm:$0xff]
    %v362 = vld [vmem:[%s1 + $0x50] sm:$0xff]
    %v363 = vld [vmem:[%s1 + $0x58] sm:$0xff]
    %v364 = vld [vmem:[%s1 + $0x60] sm:$0xff]
    %v365 = vld [vmem:[%s1 + $0x68] sm:$0xff]
    %v366 = vld [vmem:[%s1 + $0x70] sm:$0xff]
    %v367 = vld [vmem:[%s1 + $0x78] sm:$0xff]
    %v368 = vld [vmem:[%s1 + $0x80] sm:$0xff]
    %v369 = vld [vmem:[%s1 + $0x88] sm:$0xff]
    %v370 = vld [vmem:[%s1 + $0x90] sm:$0xff]
    %v371 = vld [vmem:[%s1 + $0x98] sm:$0xff]
    %v372 = vld [vmem:[%s1 + $0xa0] sm:$0xff]
    %v373 = vld [vmem:[%s1 + $0xa8] sm:$0xff]
    %v374 = vld [vmem:[%s1 + $0xb0] sm:$0xff]
    %v375 = vld [vmem:[%s1 + $0xb8] sm:$0xff]
    %v376 = vld [vmem:[%s1 + $0xc0] sm:$0xff]
    %v377 = vld [vmem:[%s1 + $0xc8] sm:$0xff]
    %v378 = vld [vmem:[%s1 + $0xd0] sm:$0xff]
    %v379 = vld [vmem:[%s1 + $0xd8] sm:$0xff]
    %v380 = vld [vmem:[%s1 + $0xe0] sm:$0xff]
    %v381 = vld [vmem:[%s1 + $0xe8] sm:$0xff]
    %v382 = vld [vmem:[%s1 + $0xf0] sm:$0xff]
    %v383 = vld [vmem:[%s1 + $0xf8] sm:$0xff]
    %v384 = vld [vmem:[%s1 + $0x100] sm:$0xff]
    %v385 = vld [vmem:[%s1 + $0x108] sm:$0xff]
    %v386 = vld [vmem:[%s1 + $0x110] sm:$0xff]
    %v387 = vld [vmem:[%s1 + $0x118] sm:$0xff]
    %v388 = vld [vmem:[%s1 + $0x120] sm:$0xff]
    %v389 = vld [vmem:[%s1 + $0x128] sm:$0xff]
    %v390 = vld [vmem:[%s1 + $0x130] sm:$0xff]
    %v391 = vld [vmem:[%s1 + $0x138] sm:$0xff]
    %v392 = vld [vmem:[%s1 + $0x140] sm:$0xff]
    %v393 = vld [vmem:[%s1 + $0x148] sm:$0xff]
    %v394 = vld [vmem:[%s1 + $0x150] sm:$0xff]
    %v395 = vld [vmem:[%s1 + $0x158] sm:$0xff]
    %v396 = vld [vmem:[%s1 + $0x160] sm:$0xff]
    %v397 = vld [vmem:[%s1 + $0x168] sm:$0xff]
    %v398 = vld [vmem:[%s1 + $0x170] sm:$0xff]
    %v399 = vld [vmem:[%s1 + $0x178] sm:$0xff]
    %v400 = vld [vmem:[%s1 + $0x180] sm:$0xff]
    %v401 = vld [vmem:[%s1 + $0x188] sm:$0xff]
    %v402 = vld [vmem:[%s1 + $0x190] sm:$0xff]
    %v403 = vld [vmem:[%s1 + $0x198] sm:$0xff]
    %v404 = vld [vmem:[%s1 + $0x1a0] sm:$0xff]
    %v405 = vld [vmem:[%s1 + $0x1a8] sm:$0xff]
    %v406 = vld [vmem:[%s1 + $0x1b0] sm:$0xff]
    %v407 = vld [vmem:[%s1 + $0x1b8] sm:$0xff]
    %v408 = vld [vmem:[%s1 + $0x1c0] sm:$0xff]
    %v409 = vld [vmem:[%s1 + $0x1c8] sm:$0xff]
    %v410 = vld [vmem:[%s1 + $0x1d0] sm:$0xff]
    %v411 = vld [vmem:[%s1 + $0x1d8] sm:$0xff]
    %v412 = vld [vmem:[%s1 + $0x1e0] sm:$0xff]
    %v413 = vld [vmem:[%s1 + $0x1e8] sm:$0xff]
    %v414 = vld [vmem:[%s1 + $0x1f0] sm:$0xff]
    %v415 = vld [vmem:[%s1 + $0x1f8] sm:$0xff]
    %v416 = vld [vmem:[%s1 + $0x200] sm:$0xff]
    %v417 = vld [vmem:[%s1 + $0x208] sm:$0xff]
    %v418 = vld [vmem:[%s1 + $0x210] sm:$0xff]
    %v419 = vld [vmem:[%s1 + $0x218] sm:$0xff]
    %v420 = vld [vmem:[%s1 + $0x220] sm:$0xff]
    %v421 = vld [vmem:[%s1 + $0x228] sm:$0xff]
    %v422 = vld [vmem:[%s1 + $0x230] sm:$0xff]
    %v423 = vld [vmem:[%s1 + $0x238] sm:$0xff]
    %v424 = vld [vmem:[%s1 + $0x240] sm:$0xff]
    %v425 = vld [vmem:[%s1 + $0x248] sm:$0xff]
    %v426 = vld [vmem:[%s1 + $0x250] sm:$0xff]
    %v427 = vld [vmem:[%s1 + $0x258] sm:$0xff]
    %v428 = vld [vmem:[%s1 + $0x260] sm:$0xff]
    %v429 = vld [vmem:[%s1 + $0x268] sm:$0xff]
    %v430 = vld [vmem:[%s1 + $0x270] sm:$0xff]
    %v431 = vld [vmem:[%s1 + $0x278] sm:$0xff]
    %v432 = vld [vmem:[%s1 + $0x280] sm:$0xff]
    %v433 = vld [vmem:[%s1 + $0x288] sm:$0xff]
    %v434 = vld [vmem:[%s1 + $0x290] sm:$0xff]
    %v435 = vld [vmem:[%s1 + $0x298] sm:$0xff]
    %v436 = vld [vmem:[%s1 + $0x2a0] sm:$0xff]
    %v437 = vld [vmem:[%s1 + $0x2a8] sm:$0xff]
    %v438 = vld [vmem:[%s1 + $0x2b0] sm:$0xff]
    %v439 = vld [vmem:[%s1 + $0x2b8] sm:$0xff]
    %v440 = vld [vmem:[%s1 + $0x2c0] sm:$0xff]
    %v441 = vld [vmem:[%s1 + $0x2c8] sm:$0xff]
    %v442 = vld [vmem:[%s1 + $0x2d0] sm:$0xff]
    %v443 = vld [vmem:[%s1 + $0x2d8] sm:$0xff]
    %v444 = vld [vmem:[%s1 + $0x2e0] sm:$0xff]
    %v445 = vld [vmem:[%s1 + $0x2e8] sm:$0xff]
    %v446 = vld [vmem:[%s1 + $0x2f0] sm:$0xff]
    %v447 = vld [vmem:[%s1 + $0x2f8] sm:$0xff]
    %v448 = vld [vmem:[%s1 + $0x300] sm:$0xff]
    %v449 = vld [vmem:[%s1 + $0x308] sm:$0xff]
    %v548 = vunpack.c.l.b16 %v352
    %v549 = vunpack.c.h.b16 %v352
    %v550 = vunpack.c.l.b16 %v353
    %v551 = vunpack.c.h.b16 %v353
    %v552 = vunpack.c.l.b16 %v354
    %v553 = vunpack.c.h.b16 %v354
    %v554 = vunpack.c.l.b16 %v355
    %v555 = vunpack.c.h.b16 %v355
    %v556 = vunpack.c.l.b16 %v356
    %v557 = vunpack.c.h.b16 %v356
    %v558 = vunpack.c.l.b16 %v357
    %v559 = vunpack.c.h.b16 %v357
    %v560 = vunpack.c.l.b16 %v358
    %v561 = vunpack.c.h.b16 %v358
    %v562 = vunpack.c.l.b16 %v359
    %v563 = vunpack.c.h.b16 %v359
    %v564 = vunpack.c.l.b16 %v360
    %v565 = vunpack.c.h.b16 %v360
    %v566 = vunpack.c.l.b16 %v361
    %v567 = vunpack.c.h.b16 %v361
    %v568 = vunpack.c.l.b16 %v362
    %v569 = vunpack.c.h.b16 %v362
    %v570 = vunpack.c.l.b16 %v363
    %v571 = vunpack.c.h.b16 %v363
    %v572 = vunpack.c.l.b16 %v364
    %v573 = vunpack.c.h.b16 %v364
    %v574 = vunpack.c.l.b16 %v365
    %v575 = vunpack.c.h.b16 %v365
    %v576 = vunpack.c.l.b16 %v366
    %v577 = vunpack.c.h.b16 %v366
    %v578 = vunpack.c.l.b16 %v367
    %v579 = vunpack.c.h.b16 %v367
    %v580 = vunpack.c.l.b16 %v368
    %v581 = vunpack.c.h.b16 %v368
    %v582 = vunpack.c.l.b16 %v369
    %v583 = vunpack.c.h.b16 %v369
    %v584 = vunpack.c.l.b16 %v370
    %v585 = vunpack.c.h.b16 %v370
    %v586 = vunpack.c.l.b16 %v371
    %v587 = vunpack.c.h.b16 %v371
    %v588 = vunpack.c.l.b16 %v372
    %v589 = vunpack.c.h.b16 %v372
    %v590 = vunpack.c.l.b16 %v373
    %v591 = vunpack.c.h.b16 %v373
    %v592 = vunpack.c.l.b16 %v374
    %v593 = vunpack.c.h.b16 %v374
    %v594 = vunpack.c.l.b16 %v375
    %v595 = vunpack.c.h.b16 %v375
    %v596 = vunpack.c.l.b16 %v376
    %v597 = vunpack.c.h.b16 %v376
    %v598 = vunpack.c.l.b16 %v377
    %v599 = vunpack.c.h.b16 %v377
    %v600 = vunpack.c.l.b16 %v378
    %v601 = vunpack.c.h.b16 %v378
    %v602 = vunpack.c.l.b16 %v379
    %v603 = vunpack.c.h.b16 %v379
    %v604 = vunpack.c.l.b16 %v380
    %v605 = vunpack.c.h.b16 %v380
    %v606 = vunpack.c.l.b16 %v381
    %v607 = vunpack.c.h.b16 %v381
    %v608 = vunpack.c.l.b16 %v382
    %v609 = vunpack.c.h.b16 %v382
    %v610 = vunpack.c.l.b16 %v383
    %v611 = vunpack.c.h.b16 %v383
    %v612 = vunpack.c.l.b16 %v384
    %v613 = vunpack.c.h.b16 %v384
    %v614 = vunpack.c.l.b16 %v385
    %v615 = vunpack.c.h.b16 %v385
    %v616 = vunpack.c.l.b16 %v386
    %v617 = vunpack.c.h.b16 %v386
    %v618 = vunpack.c.l.b16 %v387
    %v619 = vunpack.c.h.b16 %v387
    %v620 = vunpack.c.l.b16 %v388
    %v621 = vunpack.c.h.b16 %v388
    %v622 = vunpack.c.l.b16 %v389
    %v623 = vunpack.c.h.b16 %v389
    %v624 = vunpack.c.l.b16 %v390
    %v625 = vunpack.c.h.b16 %v390
    %v626 = vunpack.c.l.b16 %v391
    %v627 = vunpack.c.h.b16 %v391
    %v628 = vunpack.c.l.b16 %v392
    %v629 = vunpack.c.h.b16 %v392
    %v630 = vunpack.c.l.b16 %v393
    %v631 = vunpack.c.h.b16 %v393
    %v632 = vunpack.c.l.b16 %v394
    %v633 = vunpack.c.h.b16 %v394
    %v634 = vunpack.c.l.b16 %v395
    %v635 = vunpack.c.h.b16 %v395
    %v636 = vunpack.c.l.b16 %v396
    %v637 = vunpack.c.h.b16 %v396
    %v638 = vunpack.c.l.b16 %v397
    %v639 = vunpack.c.h.b16 %v397
    %v640 = vunpack.c.l.b16 %v398
    %v641 = vunpack.c.h.b16 %v398
    %v642 = vunpack.c.l.b16 %v399
    %v643 = vunpack.c.h.b16 %v399
    %v644 = vunpack.c.l.b16 %v400
    %v645 = vunpack.c.h.b16 %v400
    %v646 = vunpack.c.l.b16 %v401
    %v647 = vunpack.c.h.b16 %v401
    %v648 = vunpack.c.l.b16 %v402
    %v649 = vunpack.c.h.b16 %v402
    %v650 = vunpack.c.l.b16 %v403
    %v651 = vunpack.c.h.b16 %v403
    %v652 = vunpack.c.l.b16 %v404
    %v653 = vunpack.c.h.b16 %v404
    %v654 = vunpack.c.l.b16 %v405
    %v655 = vunpack.c.h.b16 %v405
    %v656 = vunpack.c.l.b16 %v406
    %v657 = vunpack.c.h.b16 %v406
    %v658 = vunpack.c.l.b16 %v407
    %v659 = vunpack.c.h.b16 %v407
    %v660 = vunpack.c.l.b16 %v408
    %v661 = vunpack.c.h.b16 %v408
    %v662 = vunpack.c.l.b16 %v409
    %v663 = vunpack.c.h.b16 %v409
    %v664 = vunpack.c.l.b16 %v410
    %v665 = vunpack.c.h.b16 %v410
    %v666 = vunpack.c.l.b16 %v411
    %v667 = vunpack.c.h.b16 %v411
    %v668 = vunpack.c.l.b16 %v412
    %v669 = vunpack.c.h.b16 %v412
    %v670 = vunpack.c.l.b16 %v413
    %v671 = vunpack.c.h.b16 %v413
    %v672 = vunpack.c.l.b16 %v414
    %v673 = vunpack.c.h.b16 %v414
    %v674 = vunpack.c.l.b16 %v415
    %v675 = vunpack.c.h.b16 %v415
    %v676 = vunpack.c.l.b16 %v416
    %v677 = vunpack.c.h.b16 %v416
    %v678 = vunpack.c.l.b16 %v417
    %v679 = vunpack.c.h.b16 %v417
    %v680 = vunpack.c.l.b16 %v418
    %v681 = vunpack.c.h.b16 %v418
    %v682 = vunpack.c.l.b16 %v419
    %v683 = vunpack.c.h.b16 %v419
    %v684 = vunpack.c.l.b16 %v420
    %v685 = vunpack.c.h.b16 %v420
    %v686 = vunpack.c.l.b16 %v421
    %v687 = vunpack.c.h.b16 %v421
    %v688 = vunpack.c.l.b16 %v422
    %v689 = vunpack.c.h.b16 %v422
    %v690 = vunpack.c.l.b16 %v423
    %v691 = vunpack.c.h.b16 %v423
    %v692 = vunpack.c.l.b16 %v424
    %v693 = vunpack.c.h.b16 %v424
    %v694 = vunpack.c.l.b16 %v425
    %v695 = vunpack.c.h.b16 %v425
    %v696 = vunpack.c.l.b16 %v426
    %v697 = vunpack.c.h.b16 %v426
    %v698 = vunpack.c.l.b16 %v427
    %v699 = vunpack.c.h.b16 %v427
    %v700 = vunpack.c.l.b16 %v428
    %v701 = vunpack.c.h.b16 %v428
    %v702 = vunpack.c.l.b16 %v429
    %v703 = vunpack.c.h.b16 %v429
    %v704 = vunpack.c.l.b16 %v430
    %v705 = vunpack.c.h.b16 %v430
    %v706 = vunpack.c.l.b16 %v431
    %v707 = vunpack.c.h.b16 %v431
    %v708 = vunpack.c.l.b16 %v432
    %v709 = vunpack.c.h.b16 %v432
    %v710 = vunpack.c.l.b16 %v433
    %v711 = vunpack.c.h.b16 %v433
    %v712 = vunpack.c.l.b16 %v434
    %v713 = vunpack.c.h.b16 %v434
    %v714 = vunpack.c.l.b16 %v435
    %v715 = vunpack.c.h.b16 %v435
    %v716 = vunpack.c.l.b16 %v436
    %v717 = vunpack.c.h.b16 %v436
    %v718 = vunpack.c.l.b16 %v437
    %v719 = vunpack.c.h.b16 %v437
    %v720 = vunpack.c.l.b16 %v438
    %v721 = vunpack.c.h.b16 %v438
    %v722 = vunpack.c.l.b16 %v439
    %v723 = vunpack.c.h.b16 %v439
    %v724 = vunpack.c.l.b16 %v440
    %v725 = vunpack.c.h.b16 %v440
    %v726 = vunpack.c.l.b16 %v441
    %v727 = vunpack.c.h.b16 %v441
    %v728 = vunpack.c.l.b16 %v442
    %v729 = vunpack.c.h.b16 %v442
    %v730 = vunpack.c.l.b16 %v443
    %v731 = vunpack.c.h.b16 %v443
    %v732 = vunpack.c.l.b16 %v444
    %v733 = vunpack.c.h.b16 %v444
    %v734 = vunpack.c.l.b16 %v445
    %v735 = vunpack.c.h.b16 %v445
    %v736 = vunpack.c.l.b16 %v446
    %v737 = vunpack.c.h.b16 %v446
    %v738 = vunpack.c.l.b16 %v447
    %v739 = vunpack.c.h.b16 %v447
    %v740 = vunpack.c.l.b16 %v448
    %v741 = vunpack.c.h.b16 %v448
    %v742 = vunpack.c.l.b16 %v449
    %v743 = vunpack.c.h.b16 %v449
    %v744 = vpack.c.b16 %v550, %v548
    %v745 = vpack.c.b16 %v551, %v549
    %v746 = vpack.c.b16 %v554, %v552
    %v747 = vpack.c.b16 %v555, %v553
    %v748 = vpack.c.b16 %v558, %v556
    %v749 = vpack.c.b16 %v559, %v557
    %v750 = vpack.c.b16 %v562, %v560
    %v751 = vpack.c.b16 %v563, %v561
    %v752 = vpack.c.b16 %v566, %v564
    %v753 = vpack.c.b16 %v567, %v565
    %v754 = vpack.c.b16 %v570, %v568
    %v755 = vpack.c.b16 %v571, %v569
    %v756 = vpack.c.b16 %v574, %v572
    %v757 = vpack.c.b16 %v575, %v573
    %v758 = vpack.c.b16 %v578, %v576
    %v759 = vpack.c.b16 %v579, %v577
    %v760 = vpack.c.b16 %v582, %v580
    %v761 = vpack.c.b16 %v583, %v581
    %v762 = vpack.c.b16 %v586, %v584
    %v763 = vpack.c.b16 %v587, %v585
    %v764 = vpack.c.b16 %v590, %v588
    %v765 = vpack.c.b16 %v591, %v589
    %v766 = vpack.c.b16 %v594, %v592
    %v767 = vpack.c.b16 %v595, %v593
    %v768 = vpack.c.b16 %v598, %v596
    %v769 = vpack.c.b16 %v599, %v597
    %v770 = vpack.c.b16 %v602, %v600
    %v771 = vpack.c.b16 %v603, %v601
    %v772 = vpack.c.b16 %v606, %v604
    %v773 = vpack.c.b16 %v607, %v605
    %v774 = vpack.c.b16 %v610, %v608
    %v775 = vpack.c.b16 %v611, %v609
    %v776 = vpack.c.b16 %v614, %v612
    %v777 = vpack.c.b16 %v615, %v613
    %v778 = vpack.c.b16 %v618, %v616
    %v779 = vpack.c.b16 %v619, %v617
    %v780 = vpack.c.b16 %v622, %v620
    %v781 = vpack.c.b16 %v623, %v621
    %v782 = vpack.c.b16 %v626, %v624
    %v783 = vpack.c.b16 %v627, %v625
    %v784 = vpack.c.b16 %v630, %v628
    %v785 = vpack.c.b16 %v631, %v629
    %v786 = vpack.c.b16 %v634, %v632
    %v787 = vpack.c.b16 %v635, %v633
    %v788 = vpack.c.b16 %v638, %v636
    %v789 = vpack.c.b16 %v639, %v637
    %v790 = vpack.c.b16 %v642, %v640
    %v791 = vpack.c.b16 %v643, %v641
    %v792 = vpack.c.b16 %v646, %v644
    %v793 = vpack.c.b16 %v647, %v645
    %v794 = vpack.c.b16 %v650, %v648
    %v795 = vpack.c.b16 %v651, %v649
    %v796 = vpack.c.b16 %v654, %v652
    %v797 = vpack.c.b16 %v655, %v653
    %v798 = vpack.c.b16 %v658, %v656
    %v799 = vpack.c.b16 %v659, %v657
    %v800 = vpack.c.b16 %v662, %v660
    %v801 = vpack.c.b16 %v663, %v661
    %v802 = vpack.c.b16 %v666, %v664
    %v803 = vpack.c.b16 %v667, %v665
    %v804 = vpack.c.b16 %v670, %v668
    %v805 = vpack.c.b16 %v671, %v669
    %v806 = vpack.c.b16 %v674, %v672
    %v807 = vpack.c.b16 %v675, %v673
    %v808 = vpack.c.b16 %v678, %v676
    %v809 = vpack.c.b16 %v679, %v677
    %v810 = vpack.c.b16 %v682, %v680
    %v811 = vpack.c.b16 %v683, %v681
    %v812 = vpack.c.b16 %v686, %v684
    %v813 = vpack.c.b16 %v687, %v685
    %v814 = vpack.c.b16 %v690, %v688
    %v815 = vpack.c.b16 %v691, %v689
    %v816 = vpack.c.b16 %v694, %v692
    %v817 = vpack.c.b16 %v695, %v693
    %v818 = vpack.c.b16 %v698, %v696
    %v819 = vpack.c.b16 %v699, %v697
    %v820 = vpack.c.b16 %v702, %v700
    %v821 = vpack.c.b16 %v703, %v701
    %v822 = vpack.c.b16 %v706, %v704
    %v823 = vpack.c.b16 %v707, %v705
    %v824 = vpack.c.b16 %v710, %v708
    %v825 = vpack.c.b16 %v711, %v709
    %v826 = vpack.c.b16 %v714, %v712
    %v827 = vpack.c.b16 %v715, %v713
    %v828 = vpack.c.b16 %v718, %v716
    %v829 = vpack.c.b16 %v719, %v717
    %v830 = vpack.c.b16 %v722, %v720
    %v831 = vpack.c.b16 %v723, %v721
    %v832 = vpack.c.b16 %v726, %v724
    %v833 = vpack.c.b16 %v727, %v725
    %v834 = vpack.c.b16 %v730, %v728
    %v835 = vpack.c.b16 %v731, %v729
    %v836 = vpack.c.b16 %v734, %v732
    %v837 = vpack.c.b16 %v735, %v733
    %v838 = vpack.c.b16 %v738, %v736
    %v839 = vpack.c.b16 %v739, %v737
    %v840 = vpack.c.b16 %v742, %v740
    %v841 = vpack.c.b16 %v743, %v741
    %vm940 = vcmask 130048
    %v942 = vsel %vm940, %v246, 0
    %v945 = vsel %vm940, %v253, 0
    %v948 = vsel %vm940, %v260, 0
    %v951 = vsel %vm940, %v267, 0
    %v954 = vsel %vm940, %v274, 0
    %v957 = vsel %vm940, %v281, 0
    %v960 = vsel %vm940, %v288, 0
    %v963 = vsel %vm940, %v295, 0
    %v966 = vsel %vm940, %v302, 0
    %v969 = vsel %vm940, %v309, 0
    %v972 = vsel %vm940, %v316, 0
    %v975 = vsel %vm940, %v323, 0
    %v978 = vsel %vm940, %v330, 0
    %v981 = vsel %vm940, %v337, 0
    %v984 = vsel %vm940, %v344, 0
    %v987 = vsel %vm940, %v351, 0
    %989 = vmatprep.subr.bf16.mxu0 %v745
    %990 = vmatpush1.bf16.msra.mxu0 %v744
    %991 = vmatprep.subr.bf16.mxu0 %v747
    %992 = vmatpush1.bf16.msra.mxu0 %v746
    %993 = vmatprep.subr.bf16.mxu0 %v749
    %994 = vmatpush1.bf16.msra.mxu0 %v748
    %995 = vmatprep.subr.bf16.mxu0 %v751
    %996 = vmatpush1.bf16.msra.mxu0 %v750
    %997 = vmatprep.subr.bf16.mxu0 %v753
    %998 = vmatpush1.bf16.msra.mxu0 %v752
    %999 = vmatprep.subr.bf16.mxu0 %v755
    %1000 = vmatpush1.bf16.msra.mxu0 %v754
    %1001 = vmatprep.subr.bf16.mxu0 %v757
    %1002 = vmatpush1.bf16.msra.mxu0 %v756
    %1003 = vmatprep.subr.bf16.mxu0 %v759
    %1004 = vmatpush1.bf16.msra.mxu0 %v758
    %1005 = vmatprep.subr.bf16.mxu0 %v761
    %1006 = vmatpush1.bf16.msra.mxu0 %v760
    %1007 = vmatprep.subr.bf16.mxu0 %v763
    %1008 = vmatpush1.bf16.msra.mxu0 %v762
    %1009 = vmatprep.subr.bf16.mxu0 %v765
    %1010 = vmatpush1.bf16.msra.mxu0 %v764
    %1011 = vmatprep.subr.bf16.mxu0 %v767
    %1012 = vmatpush1.bf16.msra.mxu0 %v766
    %1013 = vmatprep.subr.bf16.mxu0 %v769
    %1014 = vmatpush1.bf16.msra.mxu0 %v768
    %1015 = vmatprep.subr.bf16.mxu0 %v771
    %1016 = vmatpush1.bf16.msra.mxu0 %v770
    %1017 = vmatprep.subr.bf16.mxu0 %v773
    %1018 = vmatpush1.bf16.msra.mxu0 %v772
    %1019 = vmatprep.subr.bf16.mxu0 %v775
    %1020 = vmatpush1.bf16.msra.mxu0 %v774
    %1021 = vmatprep.mubr.bf16.mxu0 %v241
    %1022 = vmatmul.mubr.bf16.gmra.mrb[0].mxu0 %v240
    %v1023 = vpop.f32.mrb[0].mxu0
    %v1024 = vadd.f32 0.0, %v1023
    %v1025 = vpop.f32.mrb[0].mxu0
    %v1026 = vadd.f32 0.0, %v1025
    %v1027 = vpop.f32.mrb[0].mxu0
    %v1028 = vadd.f32 0.0, %v1027
    %v1029 = vpop.f32.mrb[0].mxu0
    %v1030 = vadd.f32 0.0, %v1029
    %1031 = vmatprep.mubr.bf16.mxu0 %v248
    %1032 = vmatmul.mubr.bf16.gmra.mrb[0].mxu0 %v247
    %v1033 = vpop.f32.mrb[0].mxu0
    %v1034 = vadd.f32 0.0, %v1033
    %v1035 = vpop.f32.mrb[0].mxu0
    %v1036 = vadd.f32 0.0, %v1035
    %v1037 = vpop.f32.mrb[0].mxu0
    %v1038 = vadd.f32 0.0, %v1037
    %v1039 = vpop.f32.mrb[0].mxu0
    %v1040 = vadd.f32 0.0, %v1039
    %1041 = vmatprep.mubr.bf16.mxu0 %v255
    %1042 = vmatmul.mubr.bf16.gmra.mrb[0].mxu0 %v254
    %v1043 = vpop.f32.mrb[0].mxu0
    %v1044 = vadd.f32 0.0, %v1043
    %v1045 = vpop.f32.mrb[0].mxu0
    %v1046 = vadd.f32 0.0, %v1045
    %v1047 = vpop.f32.mrb[0].mxu0
    %v1048 = vadd.f32 0.0, %v1047
    %v1049 = vpop.f32.mrb[0].mxu0
    %v1050 = vadd.f32 0.0, %v1049
    %1051 = vmatprep.mubr.bf16.mxu0 %v262
    %1052 = vmatmul.mubr.bf16.gmra.mrb[0].mxu0 %v261
    %v1053 = vpop.f32.mrb[0].mxu0
    %v1054 = vadd.f32 0.0, %v1053
    %v1055 = vpop.f32.mrb[0].mxu0
    %v1056 = vadd.f32 0.0, %v1055
    %v1057 = vpop.f32.mrb[0].mxu0
    %v1058 = vadd.f32 0.0, %v1057
    %v1059 = vpop.f32.mrb[0].mxu0
    %v1060 = vadd.f32 0.0, %v1059
    %1061 = vmatprep.mubr.bf16.mxu0 %v269
    %1062 = vmatmul.mubr.bf16.gmra.mrb[0].mxu0 %v268
    %v1063 = vpop.f32.mrb[0].mxu0
    %v1064 = vadd.f32 0.0, %v1063
    %v1065 = vpop.f32.mrb[0].mxu0
    %v1066 = vadd.f32 0.0, %v1065
    %v1067 = vpop.f32.mrb[0].mxu0
    %v1068 = vadd.f32 0.0, %v1067
    %v1069 = vpop.f32.mrb[0].mxu0
    %v1070 = vadd.f32 0.0, %v1069
    %1071 = vmatprep.mubr.bf16.mxu0 %v276
    %1072 = vmatmul.mubr.bf16.gmra.mrb[0].mxu0 %v275
    %v1073 = vpop.f32.mrb[0].mxu0
    %v1074 = vadd.f32 0.0, %v1073
    %v1075 = vpop.f32.mrb[0].mxu0
    %v1076 = vadd.f32 0.0, %v1075
    %v1077 = vpop.f32.mrb[0].mxu0
    %v1078 = vadd.f32 0.0, %v1077
    %v1079 = vpop.f32.mrb[0].mxu0
    %v1080 = vadd.f32 0.0, %v1079
    %1081 = vmatprep.mubr.bf16.mxu0 %v283
    %1082 = vmatmul.mubr.bf16.gmra.mrb[0].mxu0 %v282
    %v1083 = vpop.f32.mrb[0].mxu0
    %v1084 = vadd.f32 0.0, %v1083
    %v1085 = vpop.f32.mrb[0].mxu0
    %v1086 = vadd.f32 0.0, %v1085
    %v1087 = vpop.f32.mrb[0].mxu0
    %v1088 = vadd.f32 0.0, %v1087
    %v1089 = vpop.f32.mrb[0].mxu0
    %v1090 = vadd.f32 0.0, %v1089
    %1091 = vmatprep.mubr.bf16.mxu0 %v290
    %1092 = vmatmul.mubr.bf16.gmra.mrb[0].mxu0 %v289
    %v1093 = vpop.f32.mrb[0].mxu0
    %v1094 = vadd.f32 0.0, %v1093
    %v1095 = vpop.f32.mrb[0].mxu0
    %v1096 = vadd.f32 0.0, %v1095
    %v1097 = vpop.f32.mrb[0].mxu0
    %v1098 = vadd.f32 0.0, %v1097
    %v1099 = vpop.f32.mrb[0].mxu0
    %v1100 = vadd.f32 0.0, %v1099
    %1101 = vmatprep.mubr.bf16.mxu0 %v297
    %1102 = vmatmul.mubr.bf16.gmra.mrb[0].mxu0 %v296
    %v1103 = vpop.f32.mrb[0].mxu0
    %v1104 = vadd.f32 0.0, %v1103
    %v1105 = vpop.f32.mrb[0].mxu0
    %v1106 = vadd.f32 0.0, %v1105
    %v1107 = vpop.f32.mrb[0].mxu0
    %v1108 = vadd.f32 0.0, %v1107
    %v1109 = vpop.f32.mrb[0].mxu0
    %v1110 = vadd.f32 0.0, %v1109
    %1111 = vmatprep.mubr.bf16.mxu0 %v304
    %1112 = vmatmul.mubr.bf16.gmra.mrb[0].mxu0 %v303
    %v1113 = vpop.f32.mrb[0].mxu0
    %v1114 = vadd.f32 0.0, %v1113
    %v1115 = vpop.f32.mrb[0].mxu0
    %v1116 = vadd.f32 0.0, %v1115
    %v1117 = vpop.f32.mrb[0].mxu0
    %v1118 = vadd.f32 0.0, %v1117
    %v1119 = vpop.f32.mrb[0].mxu0
    %v1120 = vadd.f32 0.0, %v1119
    %1121 = vmatprep.mubr.bf16.mxu0 %v311
    %1122 = vmatmul.mubr.bf16.gmra.mrb[0].mxu0 %v310
    %v1123 = vpop.f32.mrb[0].mxu0
    %v1124 = vadd.f32 0.0, %v1123
    %v1125 = vpop.f32.mrb[0].mxu0
    %v1126 = vadd.f32 0.0, %v1125
    %v1127 = vpop.f32.mrb[0].mxu0
    %v1128 = vadd.f32 0.0, %v1127
    %v1129 = vpop.f32.mrb[0].mxu0
    %v1130 = vadd.f32 0.0, %v1129
    %1131 = vmatprep.mubr.bf16.mxu0 %v318
    %1132 = vmatmul.mubr.bf16.gmra.mrb[0].mxu0 %v317
    %v1133 = vpop.f32.mrb[0].mxu0
    %v1134 = vadd.f32 0.0, %v1133
    %v1135 = vpop.f32.mrb[0].mxu0
    %v1136 = vadd.f32 0.0, %v1135
    %v1137 = vpop.f32.mrb[0].mxu0
    %v1138 = vadd.f32 0.0, %v1137
    %v1139 = vpop.f32.mrb[0].mxu0
    %v1140 = vadd.f32 0.0, %v1139
    %1141 = vmatprep.mubr.bf16.mxu0 %v325
    %1142 = vmatmul.mubr.bf16.gmra.mrb[0].mxu0 %v324
    %v1143 = vpop.f32.mrb[0].mxu0
    %v1144 = vadd.f32 0.0, %v1143
    %v1145 = vpop.f32.mrb[0].mxu0
    %v1146 = vadd.f32 0.0, %v1145
    %v1147 = vpop.f32.mrb[0].mxu0
    %v1148 = vadd.f32 0.0, %v1147
    %v1149 = vpop.f32.mrb[0].mxu0
    %v1150 = vadd.f32 0.0, %v1149
    %1151 = vmatprep.mubr.bf16.mxu0 %v332
    %1152 = vmatmul.mubr.bf16.gmra.mrb[0].mxu0 %v331
    %v1153 = vpop.f32.mrb[0].mxu0
    %v1154 = vadd.f32 0.0, %v1153
    %v1155 = vpop.f32.mrb[0].mxu0
    %v1156 = vadd.f32 0.0, %v1155
    %v1157 = vpop.f32.mrb[0].mxu0
    %v1158 = vadd.f32 0.0, %v1157
    %v1159 = vpop.f32.mrb[0].mxu0
    %v1160 = vadd.f32 0.0, %v1159
    %1161 = vmatprep.mubr.bf16.mxu0 %v339
    %1162 = vmatmul.mubr.bf16.gmra.mrb[0].mxu0 %v338
    %v1163 = vpop.f32.mrb[0].mxu0
    %v1164 = vadd.f32 0.0, %v1163
    %v1165 = vpop.f32.mrb[0].mxu0
    %v1166 = vadd.f32 0.0, %v1165
    %v1167 = vpop.f32.mrb[0].mxu0
    %v1168 = vadd.f32 0.0, %v1167
    %v1169 = vpop.f32.mrb[0].mxu0
    %v1170 = vadd.f32 0.0, %v1169
    %1171 = vmatprep.mubr.bf16.mxu0 %v346
    %1172 = vmatmul.mubr.bf16.gmra.mrb[0].mxu0 %v345
    %v1173 = vpop.f32.mrb[0].mxu0
    %v1174 = vadd.f32 0.0, %v1173
    %v1175 = vpop.f32.mrb[0].mxu0
    %v1176 = vadd.f32 0.0, %v1175
    %v1177 = vpop.f32.mrb[0].mxu0
    %v1178 = vadd.f32 0.0, %v1177
    %v1179 = vpop.f32.mrb[0].mxu0
    %v1180 = vadd.f32 0.0, %v1179
    %1181 = vdwg.mxu0
    %1182 = vmatprep.subr.bf16.mxu0 %v777
    %1183 = vmatpush1.bf16.msra.mxu0 %v776
    %1184 = vmatprep.subr.bf16.mxu0 %v779
    %1185 = vmatpush1.bf16.msra.mxu0 %v778
    %1186 = vmatprep.subr.bf16.mxu0 %v781
    %1187 = vmatpush1.bf16.msra.mxu0 %v780
    %1188 = vmatprep.subr.bf16.mxu0 %v783
    %1189 = vmatpush1.bf16.msra.mxu0 %v782
    %1190 = vmatprep.subr.bf16.mxu0 %v785
    %1191 = vmatpush1.bf16.msra.mxu0 %v784
    %1192 = vmatprep.subr.bf16.mxu0 %v787
    %1193 = vmatpush1.bf16.msra.mxu0 %v786
    %1194 = vmatprep.subr.bf16.mxu0 %v789
    %1195 = vmatpush1.bf16.msra.mxu0 %v788
    %1196 = vmatprep.subr.bf16.mxu0 %v791
    %1197 = vmatpush1.bf16.msra.mxu0 %v790
    %1198 = vmatprep.subr.bf16.mxu0 %v793
    %1199 = vmatpush1.bf16.msra.mxu0 %v792
    %1200 = vmatprep.subr.bf16.mxu0 %v795
    %1201 = vmatpush1.bf16.msra.mxu0 %v794
    %1202 = vmatprep.subr.bf16.mxu0 %v797
    %1203 = vmatpush1.bf16.msra.mxu0 %v796
    %1204 = vmatprep.subr.bf16.mxu0 %v799
    %1205 = vmatpush1.bf16.msra.mxu0 %v798
    %1206 = vmatprep.subr.bf16.mxu0 %v801
    %1207 = vmatpush1.bf16.msra.mxu0 %v800
    %1208 = vmatprep.subr.bf16.mxu0 %v803
    %1209 = vmatpush1.bf16.msra.mxu0 %v802
    %1210 = vmatprep.subr.bf16.mxu0 %v805
    %1211 = vmatpush1.bf16.msra.mxu0 %v804
    %1212 = vmatprep.subr.bf16.mxu0 %v807
    %1213 = vmatpush1.bf16.msra.mxu0 %v806
    %1214 = vmatprep.mubr.bf16.mxu0 %v243
    %1215 = vmatmul.mubr.bf16.gmra.mrb[0].mxu0 %v242
    %v1216 = vpop.f32.mrb[0].mxu0
    %v1217 = vadd.f32 %v1024, %v1216
    %v1218 = vpop.f32.mrb[0].mxu0
    %v1219 = vadd.f32 %v1026, %v1218
    %v1220 = vpop.f32.mrb[0].mxu0
    %v1221 = vadd.f32 %v1028, %v1220
    %v1222 = vpop.f32.mrb[0].mxu0
    %v1223 = vadd.f32 %v1030, %v1222
    %1224 = vmatprep.mubr.bf16.mxu0 %v250
    %1225 = vmatmul.mubr.bf16.gmra.mrb[0].mxu0 %v249
    %v1226 = vpop.f32.mrb[0].mxu0
    %v1227 = vadd.f32 %v1034, %v1226
    %v1228 = vpop.f32.mrb[0].mxu0
    %v1229 = vadd.f32 %v1036, %v1228
    %v1230 = vpop.f32.mrb[0].mxu0
    %v1231 = vadd.f32 %v1038, %v1230
    %v1232 = vpop.f32.mrb[0].mxu0
    %v1233 = vadd.f32 %v1040, %v1232
    %1234 = vmatprep.mubr.bf16.mxu0 %v257
    %1235 = vmatmul.mubr.bf16.gmra.mrb[0].mxu0 %v256
    %v1236 = vpop.f32.mrb[0].mxu0
    %v1237 = vadd.f32 %v1044, %v1236
    %v1238 = vpop.f32.mrb[0].mxu0
    %v1239 = vadd.f32 %v1046, %v1238
    %v1240 = vpop.f32.mrb[0].mxu0
    %v1241 = vadd.f32 %v1048, %v1240
    %v1242 = vpop.f32.mrb[0].mxu0
    %v1243 = vadd.f32 %v1050, %v1242
    %1244 = vmatprep.mubr.bf16.mxu0 %v264
    %1245 = vmatmul.mubr.bf16.gmra.mrb[0].mxu0 %v263
    %v1246 = vpop.f32.mrb[0].mxu0
    %v1247 = vadd.f32 %v1054, %v1246
    %v1248 = vpop.f32.mrb[0].mxu0
    %v1249 = vadd.f32 %v1056, %v1248
    %v1250 = vpop.f32.mrb[0].mxu0
    %v1251 = vadd.f32 %v1058, %v1250
    %v1252 = vpop.f32.mrb[0].mxu0
    %v1253 = vadd.f32 %v1060, %v1252
    %1254 = vmatprep.mubr.bf16.mxu0 %v271
    %1255 = vmatmul.mubr.bf16.gmra.mrb[0].mxu0 %v270
    %v1256 = vpop.f32.mrb[0].mxu0
    %v1257 = vadd.f32 %v1064, %v1256
    %v1258 = vpop.f32.mrb[0].mxu0
    %v1259 = vadd.f32 %v1066, %v1258
    %v1260 = vpop.f32.mrb[0].mxu0
    %v1261 = vadd.f32 %v1068, %v1260
    %v1262 = vpop.f32.mrb[0].mxu0
    %v1263 = vadd.f32 %v1070, %v1262
    %1264 = vmatprep.mubr.bf16.mxu0 %v278
    %1265 = vmatmul.mubr.bf16.gmra.mrb[0].mxu0 %v277
    %v1266 = vpop.f32.mrb[0].mxu0
    %v1267 = vadd.f32 %v1074, %v1266
    %v1268 = vpop.f32.mrb[0].mxu0
    %v1269 = vadd.f32 %v1076, %v1268
    %v1270 = vpop.f32.mrb[0].mxu0
    %v1271 = vadd.f32 %v1078, %v1270
    %v1272 = vpop.f32.mrb[0].mxu0
    %v1273 = vadd.f32 %v1080, %v1272
    %1274 = vmatprep.mubr.bf16.mxu0 %v285
    %1275 = vmatmul.mubr.bf16.gmra.mrb[0].mxu0 %v284
    %v1276 = vpop.f32.mrb[0].mxu0
    %v1277 = vadd.f32 %v1084, %v1276
    %v1278 = vpop.f32.mrb[0].mxu0
    %v1279 = vadd.f32 %v1086, %v1278
    %v1280 = vpop.f32.mrb[0].mxu0
    %v1281 = vadd.f32 %v1088, %v1280
    %v1282 = vpop.f32.mrb[0].mxu0
    %v1283 = vadd.f32 %v1090, %v1282
    %1284 = vmatprep.mubr.bf16.mxu0 %v292
    %1285 = vmatmul.mubr.bf16.gmra.mrb[0].mxu0 %v291
    %v1286 = vpop.f32.mrb[0].mxu0
    %v1287 = vadd.f32 %v1094, %v1286
    %v1288 = vpop.f32.mrb[0].mxu0
    %v1289 = vadd.f32 %v1096, %v1288
    %v1290 = vpop.f32.mrb[0].mxu0
    %v1291 = vadd.f32 %v1098, %v1290
    %v1292 = vpop.f32.mrb[0].mxu0
    %v1293 = vadd.f32 %v1100, %v1292
    %1294 = vmatprep.mubr.bf16.mxu0 %v299
    %1295 = vmatmul.mubr.bf16.gmra.mrb[0].mxu0 %v298
    %v1296 = vpop.f32.mrb[0].mxu0
    %v1297 = vadd.f32 %v1104, %v1296
    %v1298 = vpop.f32.mrb[0].mxu0
    %v1299 = vadd.f32 %v1106, %v1298
    %v1300 = vpop.f32.mrb[0].mxu0
    %v1301 = vadd.f32 %v1108, %v1300
    %v1302 = vpop.f32.mrb[0].mxu0
    %v1303 = vadd.f32 %v1110, %v1302
    %1304 = vmatprep.mubr.bf16.mxu0 %v306
    %1305 = vmatmul.mubr.bf16.gmra.mrb[0].mxu0 %v305
    %v1306 = vpop.f32.mrb[0].mxu0
    %v1307 = vadd.f32 %v1114, %v1306
    %v1308 = vpop.f32.mrb[0].mxu0
    %v1309 = vadd.f32 %v1116, %v1308
    %v1310 = vpop.f32.mrb[0].mxu0
    %v1311 = vadd.f32 %v1118, %v1310
    %v1312 = vpop.f32.mrb[0].mxu0
    %v1313 = vadd.f32 %v1120, %v1312
    %1314 = vmatprep.mubr.bf16.mxu0 %v313
    %1315 = vmatmul.mubr.bf16.gmra.mrb[0].mxu0 %v312
    %v1316 = vpop.f32.mrb[0].mxu0
    %v1317 = vadd.f32 %v1124, %v1316
    %v1318 = vpop.f32.mrb[0].mxu0
    %v1319 = vadd.f32 %v1126, %v1318
    %v1320 = vpop.f32.mrb[0].mxu0
    %v1321 = vadd.f32 %v1128, %v1320
    %v1322 = vpop.f32.mrb[0].mxu0
    %v1323 = vadd.f32 %v1130, %v1322
    %1324 = vmatprep.mubr.bf16.mxu0 %v320
    %1325 = vmatmul.mubr.bf16.gmra.mrb[0].mxu0 %v319
    %v1326 = vpop.f32.mrb[0].mxu0
    %v1327 = vadd.f32 %v1134, %v1326
    %v1328 = vpop.f32.mrb[0].mxu0
    %v1329 = vadd.f32 %v1136, %v1328
    %v1330 = vpop.f32.mrb[0].mxu0
    %v1331 = vadd.f32 %v1138, %v1330
    %v1332 = vpop.f32.mrb[0].mxu0
    %v1333 = vadd.f32 %v1140, %v1332
    %1334 = vmatprep.mubr.bf16.mxu0 %v327
    %1335 = vmatmul.mubr.bf16.gmra.mrb[0].mxu0 %v326
    %v1336 = vpop.f32.mrb[0].mxu0
    %v1337 = vadd.f32 %v1144, %v1336
    %v1338 = vpop.f32.mrb[0].mxu0
    %v1339 = vadd.f32 %v1146, %v1338
    %v1340 = vpop.f32.mrb[0].mxu0
    %v1341 = vadd.f32 %v1148, %v1340
    %v1342 = vpop.f32.mrb[0].mxu0
    %v1343 = vadd.f32 %v1150, %v1342
    %1344 = vmatprep.mubr.bf16.mxu0 %v334
    %1345 = vmatmul.mubr.bf16.gmra.mrb[0].mxu0 %v333
    %v1346 = vpop.f32.mrb[0].mxu0
    %v1347 = vadd.f32 %v1154, %v1346
    %v1348 = vpop.f32.mrb[0].mxu0
    %v1349 = vadd.f32 %v1156, %v1348
    %v1350 = vpop.f32.mrb[0].mxu0
    %v1351 = vadd.f32 %v1158, %v1350
    %v1352 = vpop.f32.mrb[0].mxu0
    %v1353 = vadd.f32 %v1160, %v1352
    %1354 = vmatprep.mubr.bf16.mxu0 %v341
    %1355 = vmatmul.mubr.bf16.gmra.mrb[0].mxu0 %v340
    %v1356 = vpop.f32.mrb[0].mxu0
    %v1357 = vadd.f32 %v1164, %v1356
    %v1358 = vpop.f32.mrb[0].mxu0
    %v1359 = vadd.f32 %v1166, %v1358
    %v1360 = vpop.f32.mrb[0].mxu0
    %v1361 = vadd.f32 %v1168, %v1360
    %v1362 = vpop.f32.mrb[0].mxu0
    %v1363 = vadd.f32 %v1170, %v1362
    %1364 = vmatprep.mubr.bf16.mxu0 %v348
    %1365 = vmatmul.mubr.bf16.gmra.mrb[0].mxu0 %v347
    %v1366 = vpop.f32.mrb[0].mxu0
    %v1367 = vadd.f32 %v1174, %v1366
    %v1368 = vpop.f32.mrb[0].mxu0
    %v1369 = vadd.f32 %v1176, %v1368
    %v1370 = vpop.f32.mrb[0].mxu0
    %v1371 = vadd.f32 %v1178, %v1370
    %v1372 = vpop.f32.mrb[0].mxu0
    %v1373 = vadd.f32 %v1180, %v1372
    %1374 = vdwg.mxu0
    %1375 = vmatprep.subr.bf16.mxu0 %v809
    %1376 = vmatpush1.bf16.msra.mxu0 %v808
    %1377 = vmatprep.subr.bf16.mxu0 %v811
    %1378 = vmatpush1.bf16.msra.mxu0 %v810
    %1379 = vmatprep.subr.bf16.mxu0 %v813
    %1380 = vmatpush1.bf16.msra.mxu0 %v812
    %1381 = vmatprep.subr.bf16.mxu0 %v815
    %1382 = vmatpush1.bf16.msra.mxu0 %v814
    %1383 = vmatprep.subr.bf16.mxu0 %v817
    %1384 = vmatpush1.bf16.msra.mxu0 %v816
    %1385 = vmatprep.subr.bf16.mxu0 %v819
    %1386 = vmatpush1.bf16.msra.mxu0 %v818
    %1387 = vmatprep.subr.bf16.mxu0 %v821
    %1388 = vmatpush1.bf16.msra.mxu0 %v820
    %1389 = vmatprep.subr.bf16.mxu0 %v823
    %1390 = vmatpush1.bf16.msra.mxu0 %v822
    %1391 = vmatprep.subr.bf16.mxu0 %v825
    %1392 = vmatpush1.bf16.msra.mxu0 %v824
    %1393 = vmatprep.subr.bf16.mxu0 %v827
    %1394 = vmatpush1.bf16.msra.mxu0 %v826
    %1395 = vmatprep.subr.bf16.mxu0 %v829
    %1396 = vmatpush1.bf16.msra.mxu0 %v828
    %1397 = vmatprep.subr.bf16.mxu0 %v831
    %1398 = vmatpush1.bf16.msra.mxu0 %v830
    %1399 = vmatprep.subr.bf16.mxu0 %v833
    %1400 = vmatpush1.bf16.msra.mxu0 %v832
    %1401 = vmatprep.subr.bf16.mxu0 %v835
    %1402 = vmatpush1.bf16.msra.mxu0 %v834
    %1403 = vmatprep.subr.bf16.mxu0 %v837
    %1404 = vmatpush1.bf16.msra.mxu0 %v836
    %1405 = vmatprep.subr.bf16.mxu0 %v839
    %1406 = vmatpush1.bf16.msra.mxu0 %v838
    %1407 = vmatprep.mubr.bf16.mxu0 %v245
    %1408 = vmatmul.mubr.bf16.gmra.mrb[0].mxu0 %v244
    %v1409 = vpop.f32.mrb[0].mxu0
    %v1410 = vadd.f32 %v1217, %v1409
    %v1411 = vpop.f32.mrb[0].mxu0
    %v1412 = vadd.f32 %v1219, %v1411
    %v1413 = vpop.f32.mrb[0].mxu0
    %v1414 = vadd.f32 %v1221, %v1413
    %v1415 = vpop.f32.mrb[0].mxu0
    %v1416 = vadd.f32 %v1223, %v1415
    %1417 = vmatprep.mubr.bf16.mxu0 %v252
    %1418 = vmatmul.mubr.bf16.gmra.mrb[0].mxu0 %v251
    %v1419 = vpop.f32.mrb[0].mxu0
    %v1420 = vadd.f32 %v1227, %v1419
    %v1421 = vpop.f32.mrb[0].mxu0
    %v1422 = vadd.f32 %v1229, %v1421
    %v1423 = vpop.f32.mrb[0].mxu0
    %v1424 = vadd.f32 %v1231, %v1423
    %v1425 = vpop.f32.mrb[0].mxu0
    %v1426 = vadd.f32 %v1233, %v1425
    %1427 = vmatprep.mubr.bf16.mxu0 %v259
    %1428 = vmatmul.mubr.bf16.gmra.mrb[0].mxu0 %v258
    %v1429 = vpop.f32.mrb[0].mxu0
    %v1430 = vadd.f32 %v1237, %v1429
    %v1431 = vpop.f32.mrb[0].mxu0
    %v1432 = vadd.f32 %v1239, %v1431
    %v1433 = vpop.f32.mrb[0].mxu0
    %v1434 = vadd.f32 %v1241, %v1433
    %v1435 = vpop.f32.mrb[0].mxu0
    %v1436 = vadd.f32 %v1243, %v1435
    %1437 = vmatprep.mubr.bf16.mxu0 %v266
    %1438 = vmatmul.mubr.bf16.gmra.mrb[0].mxu0 %v265
    %v1439 = vpop.f32.mrb[0].mxu0
    %v1440 = vadd.f32 %v1247, %v1439
    %v1441 = vpop.f32.mrb[0].mxu0
    %v1442 = vadd.f32 %v1249, %v1441
    %v1443 = vpop.f32.mrb[0].mxu0
    %v1444 = vadd.f32 %v1251, %v1443
    %v1445 = vpop.f32.mrb[0].mxu0
    %v1446 = vadd.f32 %v1253, %v1445
    %1447 = vmatprep.mubr.bf16.mxu0 %v273
    %1448 = vmatmul.mubr.bf16.gmra.mrb[0].mxu0 %v272
    %v1449 = vpop.f32.mrb[0].mxu0
    %v1450 = vadd.f32 %v1257, %v1449
    %v1451 = vpop.f32.mrb[0].mxu0
    %v1452 = vadd.f32 %v1259, %v1451
    %v1453 = vpop.f32.mrb[0].mxu0
    %v1454 = vadd.f32 %v1261, %v1453
    %v1455 = vpop.f32.mrb[0].mxu0
    %v1456 = vadd.f32 %v1263, %v1455
    %1457 = vmatprep.mubr.bf16.mxu0 %v280
    %1458 = vmatmul.mubr.bf16.gmra.mrb[0].mxu0 %v279
    %v1459 = vpop.f32.mrb[0].mxu0
    %v1460 = vadd.f32 %v1267, %v1459
    %v1461 = vpop.f32.mrb[0].mxu0
    %v1462 = vadd.f32 %v1269, %v1461
    %v1463 = vpop.f32.mrb[0].mxu0
    %v1464 = vadd.f32 %v1271, %v1463
    %v1465 = vpop.f32.mrb[0].mxu0
    %v1466 = vadd.f32 %v1273, %v1465
    %1467 = vmatprep.mubr.bf16.mxu0 %v287
    %1468 = vmatmul.mubr.bf16.gmra.mrb[0].mxu0 %v286
    %v1469 = vpop.f32.mrb[0].mxu0
    %v1470 = vadd.f32 %v1277, %v1469
    %v1471 = vpop.f32.mrb[0].mxu0
    %v1472 = vadd.f32 %v1279, %v1471
    %v1473 = vpop.f32.mrb[0].mxu0
    %v1474 = vadd.f32 %v1281, %v1473
    %v1475 = vpop.f32.mrb[0].mxu0
    %v1476 = vadd.f32 %v1283, %v1475
    %1477 = vmatprep.mubr.bf16.mxu0 %v294
    %1478 = vmatmul.mubr.bf16.gmra.mrb[0].mxu0 %v293
    %v1479 = vpop.f32.mrb[0].mxu0
    %v1480 = vadd.f32 %v1287, %v1479
    %v1481 = vpop.f32.mrb[0].mxu0
    %v1482 = vadd.f32 %v1289, %v1481
    %v1483 = vpop.f32.mrb[0].mxu0
    %v1484 = vadd.f32 %v1291, %v1483
    %v1485 = vpop.f32.mrb[0].mxu0
    %v1486 = vadd.f32 %v1293, %v1485
    %1487 = vmatprep.mubr.bf16.mxu0 %v301
    %1488 = vmatmul.mubr.bf16.gmra.mrb[0].mxu0 %v300
    %v1489 = vpop.f32.mrb[0].mxu0
    %v1490 = vadd.f32 %v1297, %v1489
    %v1491 = vpop.f32.mrb[0].mxu0
    %v1492 = vadd.f32 %v1299, %v1491
    %v1493 = vpop.f32.mrb[0].mxu0
    %v1494 = vadd.f32 %v1301, %v1493
    %v1495 = vpop.f32.mrb[0].mxu0
    %v1496 = vadd.f32 %v1303, %v1495
    %1497 = vmatprep.mubr.bf16.mxu0 %v308
    %1498 = vmatmul.mubr.bf16.gmra.mrb[0].mxu0 %v307
    %v1499 = vpop.f32.mrb[0].mxu0
    %v1500 = vadd.f32 %v1307, %v1499
    %v1501 = vpop.f32.mrb[0].mxu0
    %v1502 = vadd.f32 %v1309, %v1501
    %v1503 = vpop.f32.mrb[0].mxu0
    %v1504 = vadd.f32 %v1311, %v1503
    %v1505 = vpop.f32.mrb[0].mxu0
    %v1506 = vadd.f32 %v1313, %v1505
    %1507 = vmatprep.mubr.bf16.mxu0 %v315
    %1508 = vmatmul.mubr.bf16.gmra.mrb[0].mxu0 %v314
    %v1509 = vpop.f32.mrb[0].mxu0
    %v1510 = vadd.f32 %v1317, %v1509
    %v1511 = vpop.f32.mrb[0].mxu0
    %v1512 = vadd.f32 %v1319, %v1511
    %v1513 = vpop.f32.mrb[0].mxu0
    %v1514 = vadd.f32 %v1321, %v1513
    %v1515 = vpop.f32.mrb[0].mxu0
    %v1516 = vadd.f32 %v1323, %v1515
    %1517 = vmatprep.mubr.bf16.mxu0 %v322
    %1518 = vmatmul.mubr.bf16.gmra.mrb[0].mxu0 %v321
    %v1519 = vpop.f32.mrb[0].mxu0
    %v1520 = vadd.f32 %v1327, %v1519
    %v1521 = vpop.f32.mrb[0].mxu0
    %v1522 = vadd.f32 %v1329, %v1521
    %v1523 = vpop.f32.mrb[0].mxu0
    %v1524 = vadd.f32 %v1331, %v1523
    %v1525 = vpop.f32.mrb[0].mxu0
    %v1526 = vadd.f32 %v1333, %v1525
    %1527 = vmatprep.mubr.bf16.mxu0 %v329
    %1528 = vmatmul.mubr.bf16.gmra.mrb[0].mxu0 %v328
    %v1529 = vpop.f32.mrb[0].mxu0
    %v1530 = vadd.f32 %v1337, %v1529
    %v1531 = vpop.f32.mrb[0].mxu0
    %v1532 = vadd.f32 %v1339, %v1531
    %v1533 = vpop.f32.mrb[0].mxu0
    %v1534 = vadd.f32 %v1341, %v1533
    %v1535 = vpop.f32.mrb[0].mxu0
    %v1536 = vadd.f32 %v1343, %v1535
    %1537 = vmatprep.mubr.bf16.mxu0 %v336
    %1538 = vmatmul.mubr.bf16.gmra.mrb[0].mxu0 %v335
    %v1539 = vpop.f32.mrb[0].mxu0
    %v1540 = vadd.f32 %v1347, %v1539
    %v1541 = vpop.f32.mrb[0].mxu0
    %v1542 = vadd.f32 %v1349, %v1541
    %v1543 = vpop.f32.mrb[0].mxu0
    %v1544 = vadd.f32 %v1351, %v1543
    %v1545 = vpop.f32.mrb[0].mxu0
    %v1546 = vadd.f32 %v1353, %v1545
    %1547 = vmatprep.mubr.bf16.mxu0 %v343
    %1548 = vmatmul.mubr.bf16.gmra.mrb[0].mxu0 %v342
    %v1549 = vpop.f32.mrb[0].mxu0
    %v1550 = vadd.f32 %v1357, %v1549
    %v1551 = vpop.f32.mrb[0].mxu0
    %v1552 = vadd.f32 %v1359, %v1551
    %v1553 = vpop.f32.mrb[0].mxu0
    %v1554 = vadd.f32 %v1361, %v1553
    %v1555 = vpop.f32.mrb[0].mxu0
    %v1556 = vadd.f32 %v1363, %v1555
    %1557 = vmatprep.mubr.bf16.mxu0 %v350
    %1558 = vmatmul.mubr.bf16.gmra.mrb[0].mxu0 %v349
    %v1559 = vpop.f32.mrb[0].mxu0
    %v1560 = vadd.f32 %v1367, %v1559
    %v1561 = vpop.f32.mrb[0].mxu0
    %v1562 = vadd.f32 %v1369, %v1561
    %v1563 = vpop.f32.mrb[0].mxu0
    %v1564 = vadd.f32 %v1371, %v1563
    %v1565 = vpop.f32.mrb[0].mxu0
    %v1566 = vadd.f32 %v1373, %v1565
    %1567 = vdwg.mxu0
    %1568 = vmatprep.subr.bf16.mxu0 %v841
    %1569 = vmatpush1.bf16.msra.mxu0 %v840
    %1570 = vmatprep.subr.bf16.mxu0 0
    %1571 = vmatpush1.bf16.msra.mxu0 0
    %1572 = vmatprep.subr.bf16.mxu0 0
    %1573 = vmatpush1.bf16.msra.mxu0 0
    %1574 = vmatprep.subr.bf16.mxu0 0
    %1575 = vmatpush1.bf16.msra.mxu0 0
    %1576 = vmatprep.subr.bf16.mxu0 0
    %1577 = vmatpush1.bf16.msra.mxu0 0
    %1578 = vmatprep.subr.bf16.mxu0 0
    %1579 = vmatpush1.bf16.msra.mxu0 0
    %1580 = vmatprep.subr.bf16.mxu0 0
    %1581 = vmatpush1.bf16.msra.mxu0 0
    %1582 = vmatprep.subr.bf16.mxu0 0
    %1583 = vmatpush1.bf16.msra.mxu0 0
    %1584 = vmatprep.subr.bf16.mxu0 0
    %1585 = vmatpush1.bf16.msra.mxu0 0
    %1586 = vmatprep.subr.bf16.mxu0 0
    %1587 = vmatpush1.bf16.msra.mxu0 0
    %1588 = vmatprep.subr.bf16.mxu0 0
    %1589 = vmatpush1.bf16.msra.mxu0 0
    %1590 = vmatprep.subr.bf16.mxu0 0
    %1591 = vmatpush1.bf16.msra.mxu0 0
    %1592 = vmatprep.subr.bf16.mxu0 0
    %1593 = vmatpush1.bf16.msra.mxu0 0
    %1594 = vmatprep.subr.bf16.mxu0 0
    %1595 = vmatpush1.bf16.msra.mxu0 0
    %1596 = vmatprep.subr.bf16.mxu0 0
    %1597 = vmatpush1.bf16.msra.mxu0 0
    %1598 = vmatprep.subr.bf16.mxu0 0
    %1599 = vmatpush1.bf16.msra.mxu0 0
    %1600 = vmatprep.mubr.bf16.mxu0 0
    %1601 = vmatmul.mubr.bf16.gmra.mrb[0].mxu0 %v942
    %v1602 = vpop.f32.mrb[0].mxu0
    %v1603 = vadd.f32 %v1410, %v1602
    %v1604 = vpop.f32.mrb[0].mxu0
    %v1605 = vadd.f32 %v1412, %v1604
    %v1606 = vpop.f32.mrb[0].mxu0
    %v1607 = vadd.f32 %v1414, %v1606
    %v1608 = vpop.f32.mrb[0].mxu0
    %v1609 = vadd.f32 %v1416, %v1608
    %1610 = vmatprep.mubr.bf16.mxu0 0
    %1611 = vmatmul.mubr.bf16.gmra.mrb[0].mxu0 %v945
    %v1612 = vpop.f32.mrb[0].mxu0
    %v1613 = vadd.f32 %v1420, %v1612
    %v1614 = vpop.f32.mrb[0].mxu0
    %v1615 = vadd.f32 %v1422, %v1614
    %v1616 = vpop.f32.mrb[0].mxu0
    %v1617 = vadd.f32 %v1424, %v1616
    %v1618 = vpop.f32.mrb[0].mxu0
    %v1619 = vadd.f32 %v1426, %v1618
    %1620 = vmatprep.mubr.bf16.mxu0 0
    %1621 = vmatmul.mubr.bf16.gmra.mrb[0].mxu0 %v948
    %v1622 = vpop.f32.mrb[0].mxu0
    %v1623 = vadd.f32 %v1430, %v1622
    %v1624 = vpop.f32.mrb[0].mxu0
    %v1625 = vadd.f32 %v1432, %v1624
    %v1626 = vpop.f32.mrb[0].mxu0
    %v1627 = vadd.f32 %v1434, %v1626
    %v1628 = vpop.f32.mrb[0].mxu0
    %v1629 = vadd.f32 %v1436, %v1628
    %1630 = vmatprep.mubr.bf16.mxu0 0
    %1631 = vmatmul.mubr.bf16.gmra.mrb[0].mxu0 %v951
    %v1632 = vpop.f32.mrb[0].mxu0
    %v1633 = vadd.f32 %v1440, %v1632
    %v1634 = vpop.f32.mrb[0].mxu0
    %v1635 = vadd.f32 %v1442, %v1634
    %v1636 = vpop.f32.mrb[0].mxu0
    %v1637 = vadd.f32 %v1444, %v1636
    %v1638 = vpop.f32.mrb[0].mxu0
    %v1639 = vadd.f32 %v1446, %v1638
    %1640 = vmatprep.mubr.bf16.mxu0 0
    %1641 = vmatmul.mubr.bf16.gmra.mrb[0].mxu0 %v954
    %v1642 = vpop.f32.mrb[0].mxu0
    %v1643 = vadd.f32 %v1450, %v1642
    %v1644 = vpop.f32.mrb[0].mxu0
    %v1645 = vadd.f32 %v1452, %v1644
    %v1646 = vpop.f32.mrb[0].mxu0
    %v1647 = vadd.f32 %v1454, %v1646
    %v1648 = vpop.f32.mrb[0].mxu0
    %v1649 = vadd.f32 %v1456, %v1648
    %1650 = vmatprep.mubr.bf16.mxu0 0
    %1651 = vmatmul.mubr.bf16.gmra.mrb[0].mxu0 %v957
    %v1652 = vpop.f32.mrb[0].mxu0
    %v1653 = vadd.f32 %v1460, %v1652
    %v1654 = vpop.f32.mrb[0].mxu0
    %v1655 = vadd.f32 %v1462, %v1654
    %v1656 = vpop.f32.mrb[0].mxu0
    %v1657 = vadd.f32 %v1464, %v1656
    %v1658 = vpop.f32.mrb[0].mxu0
    %v1659 = vadd.f32 %v1466, %v1658
    %1660 = vmatprep.mubr.bf16.mxu0 0
    %1661 = vmatmul.mubr.bf16.gmra.mrb[0].mxu0 %v960
    %v1662 = vpop.f32.mrb[0].mxu0
    %v1663 = vadd.f32 %v1470, %v1662
    %v1664 = vpop.f32.mrb[0].mxu0
    %v1665 = vadd.f32 %v1472, %v1664
    %v1666 = vpop.f32.mrb[0].mxu0
    %v1667 = vadd.f32 %v1474, %v1666
    %v1668 = vpop.f32.mrb[0].mxu0
    %v1669 = vadd.f32 %v1476, %v1668
    %1670 = vmatprep.mubr.bf16.mxu0 0
    %1671 = vmatmul.mubr.bf16.gmra.mrb[0].mxu0 %v963
    %v1672 = vpop.f32.mrb[0].mxu0
    %v1673 = vadd.f32 %v1480, %v1672
    %v1674 = vpop.f32.mrb[0].mxu0
    %v1675 = vadd.f32 %v1482, %v1674
    %v1676 = vpop.f32.mrb[0].mxu0
    %v1677 = vadd.f32 %v1484, %v1676
    %v1678 = vpop.f32.mrb[0].mxu0
    %v1679 = vadd.f32 %v1486, %v1678
    %1680 = vmatprep.mubr.bf16.mxu0 0
    %1681 = vmatmul.mubr.bf16.gmra.mrb[0].mxu0 %v966
    %v1682 = vpop.f32.mrb[0].mxu0
    %v1683 = vadd.f32 %v1490, %v1682
    %v1684 = vpop.f32.mrb[0].mxu0
    %v1685 = vadd.f32 %v1492, %v1684
    %v1686 = vpop.f32.mrb[0].mxu0
    %v1687 = vadd.f32 %v1494, %v1686
    %v1688 = vpop.f32.mrb[0].mxu0
    %v1689 = vadd.f32 %v1496, %v1688
    %1690 = vmatprep.mubr.bf16.mxu0 0
    %1691 = vmatmul.mubr.bf16.gmra.mrb[0].mxu0 %v969
    %v1692 = vpop.f32.mrb[0].mxu0
    %v1693 = vadd.f32 %v1500, %v1692
    %v1694 = vpop.f32.mrb[0].mxu0
    %v1695 = vadd.f32 %v1502, %v1694
    %v1696 = vpop.f32.mrb[0].mxu0
    %v1697 = vadd.f32 %v1504, %v1696
    %v1698 = vpop.f32.mrb[0].mxu0
    %v1699 = vadd.f32 %v1506, %v1698
    %1700 = vmatprep.mubr.bf16.mxu0 0
    %1701 = vmatmul.mubr.bf16.gmra.mrb[0].mxu0 %v972
    %v1702 = vpop.f32.mrb[0].mxu0
    %v1703 = vadd.f32 %v1510, %v1702
    %v1704 = vpop.f32.mrb[0].mxu0
    %v1705 = vadd.f32 %v1512, %v1704
    %v1706 = vpop.f32.mrb[0].mxu0
    %v1707 = vadd.f32 %v1514, %v1706
    %v1708 = vpop.f32.mrb[0].mxu0
    %v1709 = vadd.f32 %v1516, %v1708
    %1710 = vmatprep.mubr.bf16.mxu0 0
    %1711 = vmatmul.mubr.bf16.gmra.mrb[0].mxu0 %v975
    %v1712 = vpop.f32.mrb[0].mxu0
    %v1713 = vadd.f32 %v1520, %v1712
    %v1714 = vpop.f32.mrb[0].mxu0
    %v1715 = vadd.f32 %v1522, %v1714
    %v1716 = vpop.f32.mrb[0].mxu0
    %v1717 = vadd.f32 %v1524, %v1716
    %v1718 = vpop.f32.mrb[0].mxu0
    %v1719 = vadd.f32 %v1526, %v1718
    %1720 = vmatprep.mubr.bf16.mxu0 0
    %1721 = vmatmul.mubr.bf16.gmra.mrb[0].mxu0 %v978
    %v1722 = vpop.f32.mrb[0].mxu0
    %v1723 = vadd.f32 %v1530, %v1722
    %v1724 = vpop.f32.mrb[0].mxu0
    %v1725 = vadd.f32 %v1532, %v1724
    %v1726 = vpop.f32.mrb[0].mxu0
    %v1727 = vadd.f32 %v1534, %v1726
    %v1728 = vpop.f32.mrb[0].mxu0
    %v1729 = vadd.f32 %v1536, %v1728
    %1730 = vmatprep.mubr.bf16.mxu0 0
    %1731 = vmatmul.mubr.bf16.gmra.mrb[0].mxu0 %v981
    %v1732 = vpop.f32.mrb[0].mxu0
    %v1733 = vadd.f32 %v1540, %v1732
    %v1734 = vpop.f32.mrb[0].mxu0
    %v1735 = vadd.f32 %v1542, %v1734
    %v1736 = vpop.f32.mrb[0].mxu0
    %v1737 = vadd.f32 %v1544, %v1736
    %v1738 = vpop.f32.mrb[0].mxu0
    %v1739 = vadd.f32 %v1546, %v1738
    %1740 = vmatprep.mubr.bf16.mxu0 0
    %1741 = vmatmul.mubr.bf16.gmra.mrb[0].mxu0 %v984
    %v1742 = vpop.f32.mrb[0].mxu0
    %v1743 = vadd.f32 %v1550, %v1742
    %v1744 = vpop.f32.mrb[0].mxu0
    %v1745 = vadd.f32 %v1552, %v1744
    %v1746 = vpop.f32.mrb[0].mxu0
    %v1747 = vadd.f32 %v1554, %v1746
    %v1748 = vpop.f32.mrb[0].mxu0
    %v1749 = vadd.f32 %v1556, %v1748
    %1750 = vmatprep.mubr.bf16.mxu0 0
    %1751 = vmatmul.mubr.bf16.gmra.mrb[0].mxu0 %v987
    %v1752 = vpop.f32.mrb[0].mxu0
    %v1753 = vadd.f32 %v1560, %v1752
    %v1754 = vpop.f32.mrb[0].mxu0
    %v1755 = vadd.f32 %v1562, %v1754
    %v1756 = vpop.f32.mrb[0].mxu0
    %v1757 = vadd.f32 %v1564, %v1756
    %v1758 = vpop.f32.mrb[0].mxu0
    %v1759 = vadd.f32 %v1566, %v1758
    %1760 = vdwg.mxu0
    %v1761 = vpack.c.bf16 %v1607, %v1603
    %v1762 = vpack.c.bf16 %v1609, %v1605
    %v1763 = vpack.c.bf16 %v1617, %v1613
    %v1764 = vpack.c.bf16 %v1619, %v1615
    %v1765 = vpack.c.bf16 %v1627, %v1623
    %v1766 = vpack.c.bf16 %v1629, %v1625
    %v1767 = vpack.c.bf16 %v1637, %v1633
    %v1768 = vpack.c.bf16 %v1639, %v1635
    %v1769 = vpack.c.bf16 %v1647, %v1643
    %v1770 = vpack.c.bf16 %v1649, %v1645
    %v1771 = vpack.c.bf16 %v1657, %v1653
    %v1772 = vpack.c.bf16 %v1659, %v1655
    %v1773 = vpack.c.bf16 %v1667, %v1663
    %v1774 = vpack.c.bf16 %v1669, %v1665
    %v1775 = vpack.c.bf16 %v1677, %v1673
    %v1776 = vpack.c.bf16 %v1679, %v1675
    %v1777 = vpack.c.bf16 %v1687, %v1683
    %v1778 = vpack.c.bf16 %v1689, %v1685
    %v1779 = vpack.c.bf16 %v1697, %v1693
    %v1780 = vpack.c.bf16 %v1699, %v1695
    %v1781 = vpack.c.bf16 %v1707, %v1703
    %v1782 = vpack.c.bf16 %v1709, %v1705
    %v1783 = vpack.c.bf16 %v1717, %v1713
    %v1784 = vpack.c.bf16 %v1719, %v1715
    %v1785 = vpack.c.bf16 %v1727, %v1723
    %v1786 = vpack.c.bf16 %v1729, %v1725
    %v1787 = vpack.c.bf16 %v1737, %v1733
    %v1788 = vpack.c.bf16 %v1739, %v1735
    %v1789 = vpack.c.bf16 %v1747, %v1743
    %v1790 = vpack.c.bf16 %v1749, %v1745
    %v1791 = vpack.c.bf16 %v1757, %v1753
    %v1792 = vpack.c.bf16 %v1759, %v1755
    %v1793 = vld [vmem:[%s2] sm:$0xf]
    %v1794 = vld [vmem:[%s2 + $0x4] sm:$0xf]
    %v1795 = vld [vmem:[%s2 + $0x8] sm:$0xf]
    %v1796 = vld [vmem:[%s2 + $0xc] sm:$0xf]
    %v1797 = vld [vmem:[%s2 + $0x10] sm:$0xf]
    %v1798 = vld [vmem:[%s2 + $0x14] sm:$0xf]
    %v1799 = vld [vmem:[%s2 + $0x18] sm:$0xf]
    %v1800 = vld [vmem:[%s2 + $0x1c] sm:$0xf]
    %v1801 = vld [vmem:[%s2 + $0x20] sm:$0xf]
    %v1802 = vld [vmem:[%s2 + $0x24] sm:$0xf]
    %v1803 = vld [vmem:[%s2 + $0x28] sm:$0xf]
    %v1804 = vld [vmem:[%s2 + $0x2c] sm:$0xf]
    %v1805 = vld [vmem:[%s2 + $0x30] sm:$0xf]
    %v1806 = vld [vmem:[%s2 + $0x34] sm:$0xf]
    %v1807 = vld [vmem:[%s2 + $0x38] sm:$0xf]
    %v1808 = vld [vmem:[%s2 + $0x3c] sm:$0xf]
    %v1809 = vld [vmem:[%s2 + $0x40] sm:$0xf]
    %v1810 = vld [vmem:[%s2 + $0x44] sm:$0xf]
    %v1811 = vld [vmem:[%s2 + $0x48] sm:$0xf]
    %v1812 = vld [vmem:[%s2 + $0x4c] sm:$0xf]
    %v1813 = vld [vmem:[%s2 + $0x50] sm:$0xf]
    %v1814 = vld [vmem:[%s2 + $0x54] sm:$0xf]
    %v1815 = vld [vmem:[%s2 + $0x58] sm:$0xf]
    %v1816 = vld [vmem:[%s2 + $0x5c] sm:$0xf]
    %v1817 = vld [vmem:[%s2 + $0x60] sm:$0xf]
    %v1818 = vld [vmem:[%s2 + $0x64] sm:$0xf]
    %v1819 = vld [vmem:[%s2 + $0x68] sm:$0xf]
    %v1820 = vld [vmem:[%s2 + $0x6c] sm:$0xf]
    %v1821 = vld [vmem:[%s2 + $0x70] sm:$0xf]
    %v1822 = vld [vmem:[%s2 + $0x74] sm:$0xf]
    %v1823 = vld [vmem:[%s2 + $0x78] sm:$0xf]
    %v1824 = vld [vmem:[%s2 + $0x7c] sm:$0xf]
    %v1857 = vunpack.c.l.b16 %v1793
    %v1858 = vunpack.c.l.b16 %v1794
    %v1859 = vunpack.c.l.b16 %v1795
    %v1860 = vunpack.c.l.b16 %v1796
    %v1861 = vunpack.c.l.b16 %v1797
    %v1862 = vunpack.c.l.b16 %v1798
    %v1863 = vunpack.c.l.b16 %v1799
    %v1864 = vunpack.c.l.b16 %v1800
    %v1865 = vunpack.c.l.b16 %v1801
    %v1866 = vunpack.c.l.b16 %v1802
    %v1867 = vunpack.c.l.b16 %v1803
    %v1868 = vunpack.c.l.b16 %v1804
    %v1869 = vunpack.c.l.b16 %v1805
    %v1870 = vunpack.c.l.b16 %v1806
    %v1871 = vunpack.c.l.b16 %v1807
    %v1872 = vunpack.c.l.b16 %v1808
    %v1873 = vunpack.c.l.b16 %v1809
    %v1874 = vunpack.c.l.b16 %v1810
    %v1875 = vunpack.c.l.b16 %v1811
    %v1876 = vunpack.c.l.b16 %v1812
    %v1877 = vunpack.c.l.b16 %v1813
    %v1878 = vunpack.c.l.b16 %v1814
    %v1879 = vunpack.c.l.b16 %v1815
    %v1880 = vunpack.c.l.b16 %v1816
    %v1881 = vunpack.c.l.b16 %v1817
    %v1882 = vunpack.c.l.b16 %v1818
    %v1883 = vunpack.c.l.b16 %v1819
    %v1884 = vunpack.c.l.b16 %v1820
    %v1885 = vunpack.c.l.b16 %v1821
    %v1886 = vunpack.c.l.b16 %v1822
    %v1887 = vunpack.c.l.b16 %v1823
    %v1888 = vunpack.c.l.b16 %v1824
    %v1889 = vpack.c.b16 %v1858, %v1857
    %v1890 = vpack.c.b16 %v1860, %v1859
    %v1891 = vpack.c.b16 %v1862, %v1861
    %v1892 = vpack.c.b16 %v1864, %v1863
    %v1893 = vpack.c.b16 %v1866, %v1865
    %v1894 = vpack.c.b16 %v1868, %v1867
    %v1895 = vpack.c.b16 %v1870, %v1869
    %v1896 = vpack.c.b16 %v1872, %v1871
    %v1897 = vpack.c.b16 %v1874, %v1873
    %v1898 = vpack.c.b16 %v1876, %v1875
    %v1899 = vpack.c.b16 %v1878, %v1877
    %v1900 = vpack.c.b16 %v1880, %v1879
    %v1901 = vpack.c.b16 %v1882, %v1881
    %v1902 = vpack.c.b16 %v1884, %v1883
    %v1903 = vpack.c.b16 %v1886, %v1885
    %v1904 = vpack.c.b16 %v1888, %v1887
    %1921 = vmatprep.subr.bf16.mxu0 0
    %1922 = vmatpush1.bf16.msra.mxu0 %v1889
    %1923 = vmatprep.subr.bf16.mxu0 0
    %1924 = vmatpush1.bf16.msra.mxu0 %v1890
    %1925 = vmatprep.subr.bf16.mxu0 0
    %1926 = vmatpush1.bf16.msra.mxu0 %v1891
    %1927 = vmatprep.subr.bf16.mxu0 0
    %1928 = vmatpush1.bf16.msra.mxu0 %v1892
    %1929 = vmatprep.subr.bf16.mxu0 0
    %1930 = vmatpush1.bf16.msra.mxu0 %v1893
    %1931 = vmatprep.subr.bf16.mxu0 0
    %1932 = vmatpush1.bf16.msra.mxu0 %v1894
    %1933 = vmatprep.subr.bf16.mxu0 0
    %1934 = vmatpush1.bf16.msra.mxu0 %v1895
    %1935 = vmatprep.subr.bf16.mxu0 0
    %1936 = vmatpush1.bf16.msra.mxu0 %v1896
    %1937 = vmatprep.subr.bf16.mxu0 0
    %1938 = vmatpush1.bf16.msra.mxu0 %v1897
    %1939 = vmatprep.subr.bf16.mxu0 0
    %1940 = vmatpush1.bf16.msra.mxu0 %v1898
    %1941 = vmatprep.subr.bf16.mxu0 0
    %1942 = vmatpush1.bf16.msra.mxu0 %v1899
    %1943 = vmatprep.subr.bf16.mxu0 0
    %1944 = vmatpush1.bf16.msra.mxu0 %v1900
    %1945 = vmatprep.subr.bf16.mxu0 0
    %1946 = vmatpush1.bf16.msra.mxu0 %v1901
    %1947 = vmatprep.subr.bf16.mxu0 0
    %1948 = vmatpush1.bf16.msra.mxu0 %v1902
    %1949 = vmatprep.subr.bf16.mxu0 0
    %1950 = vmatpush1.bf16.msra.mxu0 %v1903
    %1951 = vmatprep.subr.bf16.mxu0 0
    %1952 = vmatpush1.bf16.msra.mxu0 %v1904
    %1953 = vmatprep.mubr.bf16.mxu0 %v1762
    %1954 = vmatmul.mubr.bf16.gmra.mrb[0].mxu0 %v1761
    %v1955 = vpop.f32.mrb[0].mxu0
    %v1956 = vadd.f32 0.0, %v1955
    %v1957 = vpop.f32.mrb[0].mxu0
    %v1958 = vpop.f32.mrb[0].mxu0
    %v1959 = vadd.f32 0.0, %v1958
    %v1960 = vpop.f32.mrb[0].mxu0
    %1961 = vmatprep.mubr.bf16.mxu0 %v1764
    %1962 = vmatmul.mubr.bf16.gmra.mrb[0].mxu0 %v1763
    %v1963 = vpop.f32.mrb[0].mxu0
    %v1964 = vadd.f32 0.0, %v1963
    %v1965 = vpop.f32.mrb[0].mxu0
    %v1966 = vpop.f32.mrb[0].mxu0
    %v1967 = vadd.f32 0.0, %v1966
    %v1968 = vpop.f32.mrb[0].mxu0
    %1969 = vmatprep.mubr.bf16.mxu0 %v1766
    %1970 = vmatmul.mubr.bf16.gmra.mrb[0].mxu0 %v1765
    %v1971 = vpop.f32.mrb[0].mxu0
    %v1972 = vadd.f32 0.0, %v1971
    %v1973 = vpop.f32.mrb[0].mxu0
    %v1974 = vpop.f32.mrb[0].mxu0
    %v1975 = vadd.f32 0.0, %v1974
    %v1976 = vpop.f32.mrb[0].mxu0
    %1977 = vmatprep.mubr.bf16.mxu0 %v1768
    %1978 = vmatmul.mubr.bf16.gmra.mrb[0].mxu0 %v1767
    %v1979 = vpop.f32.mrb[0].mxu0
    %v1980 = vadd.f32 0.0, %v1979
    %v1981 = vpop.f32.mrb[0].mxu0
    %v1982 = vpop.f32.mrb[0].mxu0
    %v1983 = vadd.f32 0.0, %v1982
    %v1984 = vpop.f32.mrb[0].mxu0
    %1985 = vmatprep.mubr.bf16.mxu0 %v1770
    %1986 = vmatmul.mubr.bf16.gmra.mrb[0].mxu0 %v1769
    %v1987 = vpop.f32.mrb[0].mxu0
    %v1988 = vadd.f32 0.0, %v1987
    %v1989 = vpop.f32.mrb[0].mxu0
    %v1990 = vpop.f32.mrb[0].mxu0
    %v1991 = vadd.f32 0.0, %v1990
    %v1992 = vpop.f32.mrb[0].mxu0
    %1993 = vmatprep.mubr.bf16.mxu0 %v1772
    %1994 = vmatmul.mubr.bf16.gmra.mrb[0].mxu0 %v1771
    %v1995 = vpop.f32.mrb[0].mxu0
    %v1996 = vadd.f32 0.0, %v1995
    %v1997 = vpop.f32.mrb[0].mxu0
    %v1998 = vpop.f32.mrb[0].mxu0
    %v1999 = vadd.f32 0.0, %v1998
    %v2000 = vpop.f32.mrb[0].mxu0
    %2001 = vmatprep.mubr.bf16.mxu0 %v1774
    %2002 = vmatmul.mubr.bf16.gmra.mrb[0].mxu0 %v1773
    %v2003 = vpop.f32.mrb[0].mxu0
    %v2004 = vadd.f32 0.0, %v2003
    %v2005 = vpop.f32.mrb[0].mxu0
    %v2006 = vpop.f32.mrb[0].mxu0
    %v2007 = vadd.f32 0.0, %v2006
    %v2008 = vpop.f32.mrb[0].mxu0
    %2009 = vmatprep.mubr.bf16.mxu0 %v1776
    %2010 = vmatmul.mubr.bf16.gmra.mrb[0].mxu0 %v1775
    %v2011 = vpop.f32.mrb[0].mxu0
    %v2012 = vadd.f32 0.0, %v2011
    %v2013 = vpop.f32.mrb[0].mxu0
    %v2014 = vpop.f32.mrb[0].mxu0
    %v2015 = vadd.f32 0.0, %v2014
    %v2016 = vpop.f32.mrb[0].mxu0
    %2017 = vmatprep.mubr.bf16.mxu0 %v1778
    %2018 = vmatmul.mubr.bf16.gmra.mrb[0].mxu0 %v1777
    %v2019 = vpop.f32.mrb[0].mxu0
    %v2020 = vadd.f32 0.0, %v2019
    %v2021 = vpop.f32.mrb[0].mxu0
    %v2022 = vpop.f32.mrb[0].mxu0
    %v2023 = vadd.f32 0.0, %v2022
    %v2024 = vpop.f32.mrb[0].mxu0
    %2025 = vmatprep.mubr.bf16.mxu0 %v1780
    %2026 = vmatmul.mubr.bf16.gmra.mrb[0].mxu0 %v1779
    %v2027 = vpop.f32.mrb[0].mxu0
    %v2028 = vadd.f32 0.0, %v2027
    %v2029 = vpop.f32.mrb[0].mxu0
    %v2030 = vpop.f32.mrb[0].mxu0
    %v2031 = vadd.f32 0.0, %v2030
    %v2032 = vpop.f32.mrb[0].mxu0
    %2033 = vmatprep.mubr.bf16.mxu0 %v1782
    %2034 = vmatmul.mubr.bf16.gmra.mrb[0].mxu0 %v1781
    %v2035 = vpop.f32.mrb[0].mxu0
    %v2036 = vadd.f32 0.0, %v2035
    %v2037 = vpop.f32.mrb[0].mxu0
    %v2038 = vpop.f32.mrb[0].mxu0
    %v2039 = vadd.f32 0.0, %v2038
    %v2040 = vpop.f32.mrb[0].mxu0
    %2041 = vmatprep.mubr.bf16.mxu0 %v1784
    %2042 = vmatmul.mubr.bf16.gmra.mrb[0].mxu0 %v1783
    %v2043 = vpop.f32.mrb[0].mxu0
    %v2044 = vadd.f32 0.0, %v2043
    %v2045 = vpop.f32.mrb[0].mxu0
    %v2046 = vpop.f32.mrb[0].mxu0
    %v2047 = vadd.f32 0.0, %v2046
    %v2048 = vpop.f32.mrb[0].mxu0
    %2049 = vmatprep.mubr.bf16.mxu0 %v1786
    %2050 = vmatmul.mubr.bf16.gmra.mrb[0].mxu0 %v1785
    %v2051 = vpop.f32.mrb[0].mxu0
    %v2052 = vadd.f32 0.0, %v2051
    %v2053 = vpop.f32.mrb[0].mxu0
    %v2054 = vpop.f32.mrb[0].mxu0
    %v2055 = vadd.f32 0.0, %v2054
    %v2056 = vpop.f32.mrb[0].mxu0
    %2057 = vmatprep.mubr.bf16.mxu0 %v1788
    %2058 = vmatmul.mubr.bf16.gmra.mrb[0].mxu0 %v1787
    %v2059 = vpop.f32.mrb[0].mxu0
    %v2060 = vadd.f32 0.0, %v2059
    %v2061 = vpop.f32.mrb[0].mxu0
    %v2062 = vpop.f32.mrb[0].mxu0
    %v2063 = vadd.f32 0.0, %v2062
    %v2064 = vpop.f32.mrb[0].mxu0
    %2065 = vmatprep.mubr.bf16.mxu0 %v1790
    %2066 = vmatmul.mubr.bf16.gmra.mrb[0].mxu0 %v1789
    %v2067 = vpop.f32.mrb[0].mxu0
    %v2068 = vadd.f32 0.0, %v2067
    %v2069 = vpop.f32.mrb[0].mxu0
    %v2070 = vpop.f32.mrb[0].mxu0
    %v2071 = vadd.f32 0.0, %v2070
    %v2072 = vpop.f32.mrb[0].mxu0
    %2073 = vmatprep.mubr.bf16.mxu0 %v1792
    %2074 = vmatmul.mubr.bf16.gmra.mrb[0].mxu0 %v1791
    %v2075 = vpop.f32.mrb[0].mxu0
    %v2076 = vadd.f32 0.0, %v2075
    %v2077 = vpop.f32.mrb[0].mxu0
    %v2078 = vpop.f32.mrb[0].mxu0
    %v2079 = vadd.f32 0.0, %v2078
    %v2080 = vpop.f32.mrb[0].mxu0
    %2081 = vdwg.mxu0
    %2082 = vst [vmem:[#allocation2] sm:$0xff] %v1956
    %2083 = vst [vmem:[#allocation2 + $0x8] sm:$0xff] %v1959
    %2084 = vst [vmem:[#allocation2 + $0x10] sm:$0xff] %v1964
    %2085 = vst [vmem:[#allocation2 + $0x18] sm:$0xff] %v1967
    %2086 = vst [vmem:[#allocation2 + $0x20] sm:$0xff] %v1972
    %2087 = vst [vmem:[#allocation2 + $0x28] sm:$0xff] %v1975
    %2088 = vst [vmem:[#allocation2 + $0x30] sm:$0xff] %v1980
    %2089 = vst [vmem:[#allocation2 + $0x38] sm:$0xff] %v1983
    %2090 = vst [vmem:[#allocation2 + $0x40] sm:$0xff] %v1988
    %2091 = vst [vmem:[#allocation2 + $0x48] sm:$0xff] %v1991
    %2092 = vst [vmem:[#allocation2 + $0x50] sm:$0xff] %v1996
    %2093 = vst [vmem:[#allocation2 + $0x58] sm:$0xff] %v1999
    %2094 = vst [vmem:[#allocation2 + $0x60] sm:$0xff] %v2004
    %2095 = vst [vmem:[#allocation2 + $0x68] sm:$0xff] %v2007
    %2096 = vst [vmem:[#allocation2 + $0x70] sm:$0xff] %v2012
    %2097 = vst [vmem:[#allocation2 + $0x78] sm:$0xff] %v2015
    %2098 = vst [vmem:[#allocation2 + $0x80] sm:$0xff] %v2020
    %2099 = vst [vmem:[#allocation2 + $0x88] sm:$0xff] %v2023
    %2100 = vst [vmem:[#allocation2 + $0x90] sm:$0xff] %v2028
    %2101 = vst [vmem:[#allocation2 + $0x98] sm:$0xff] %v2031
    %2102 = vst [vmem:[#allocation2 + $0xa0] sm:$0xff] %v2036
    %2103 = vst [vmem:[#allocation2 + $0xa8] sm:$0xff] %v2039
    %2104 = vst [vmem:[#allocation2 + $0xb0] sm:$0xff] %v2044
    %2105 = vst [vmem:[#allocation2 + $0xb8] sm:$0xff] %v2047
    %2106 = vst [vmem:[#allocation2 + $0xc0] sm:$0xff] %v2052
    %2107 = vst [vmem:[#allocation2 + $0xc8] sm:$0xff] %v2055
    %2108 = vst [vmem:[#allocation2 + $0xd0] sm:$0xff] %v2060
    %2109 = vst [vmem:[#allocation2 + $0xd8] sm:$0xff] %v2063
    %2110 = vst [vmem:[#allocation2 + $0xe0] sm:$0xff] %v2068
    %2111 = vst [vmem:[#allocation2 + $0xe8] sm:$0xff] %v2071
    %2112 = vst [vmem:[#allocation2 + $0xf0] sm:$0xff] %v2076
    %2113 = vst [vmem:[#allocation2 + $0xf8] sm:$0xff] %v2079
    // Predicated region
    $region14: #{tpu_custom_call.1} parent=1 // pred_check
      _
    $region15: #{tpu_custom_call.1} parent=1 // pred_check_branch
      %2115 = sbr.rel (0) target = $region17
    $region16: #{tpu_custom_call.1} parent=1 // pred_region
      %s2117 = ssub.s32 4096, 4096
      %2118 = vsyncadd [#allocation3], %s2117
      %s2119 = sshll.u32 [#allocation2], 4
      %s2120 = int_to_ptr.vmem [resolvable:$true] %s2119
      %2125 = dma.vmem_to_hbm [thread:$0]  %s2120, 4096, %s3, [#allocation3], 128, 128, 8
    $region17: #{tpu_custom_call.1} parent=1 // pred_fallthru
      _
    // Predicated region
    $region18: #{tpu_custom_call.1} parent=1 // pred_check
      _
    $region19: #{tpu_custom_call.1} parent=1 // pred_check_branch
      %2127 = sbr.rel (0) target = $region21
    $region20: #{tpu_custom_call.1} parent=1 // pred_region
      %2128 = dma.done [#allocation3], 4096
    $region21: #{tpu_custom_call.1} parent=1 // pred_fallthru
      _
    %2129 = vsyncpa [#allocation3], 1

</llo_original>
